<compile_context>
chip_gen: v7x
topology: tpu7x:2x2x1
jax: 0.10.0
libtpu: 0.0.40
codegen_flags: <defaults>
</compile_context>

<pallas_src>
import math
import jax
import jax.numpy as jnp
from jax.experimental import pallas as pl
from jax.experimental.pallas import tpu as pltpu

# --- small synthetic shapes consistent with the module's forward -------------
B = 2                                # spec example batch (raise to mult. of 8 in prod)
CLIP_DIM = 32                        # synthetic clip_dim
TXT_DIM = 48                         # synthetic txt_dim
D = min(CLIP_DIM, TXT_DIM)           # fusion dim = 32
SEQ = 3                              # [img, title, summary] tokens
NUM_CHANNELS = 8
CH_EMB = 16
YEAR_P = 8
DATE_P = 16
DATE_IN = 6
CY_H = 16
HEAD_H = 64                          # head_hidden_dim (small)
NHEAD = 4
HEAD_DIM = D // NHEAD
META = YEAR_P + CH_EMB + CY_H + DATE_P
JOINT = D + META                     # 88
EPS = 1e-5                           # PyTorch LayerNorm default eps

R = B * SEQ                          # 6 fusion tokens
C = NHEAD * R                        # 24 score lanes (head-major, 6 per head)
PACK_IN = CLIP_DIM + 2 * TXT_DIM     # 128: one lane tile for the fused modality matmul
LANES = 128
META_ROW0 = 8                        # metadata rows start here in the merged data slab
DATA_ROWS = 16
META_COLS = 16                       # [date(0:6), year(6), pad(7), onehot(8:16)]
OUT_LANES = 128                      # lane-dense output block
SCALE = 1.0 / math.sqrt(HEAD_DIM)

BRANCHES = (('pooled', 0, D),
            ('yr', D, YEAR_P),
            ('ch', D + YEAR_P, CH_EMB),
            ('cy', D + YEAR_P + CH_EMB, CY_H),
            ('date', D + YEAR_P + CH_EMB + CY_H, DATE_P))


# =============================== host-side packing ===========================
class _Packer:
    """Packs named parameter blocks into one [rows, 128] slab.

    Multi-row blocks (matrices / constants) start at a multiple of `align`
    rows; 1-row params are packed densely (1-row alignment) so the ~30 vector
    params no longer burn an 8-row block each.
    """

    def __init__(self, align):
        self.align = align
        self.rows = 0
        self.layout = {}
        self._blocks = []

    def add(self, name, arr):
        arr = jnp.asarray(arr, jnp.float32)
        if arr.ndim == 1:
            arr = arr[None, :]
        nr, nc = arr.shape
        assert nc <= LANES, name
        a = self.align if nr > 1 else 1
        r0 = ((self.rows + a - 1) // a) * a
        self.layout[name] = (r0, nr, nc)
        self._blocks.append((r0, arr))
        self.rows = r0 + nr

    def pack(self, dtype):
        total = ((self.rows + self.align - 1) // self.align) * self.align
        slab = jnp.zeros((total, LANES), jnp.float32)
        for r0, arr in self._blocks:
            nr, nc = arr.shape
            slab = slab.at[r0:r0 + nr, :nc].set(arr)
        return slab.astype(dtype)


def _attention_constants():
    """Hoisted constant masks (no iota / div-by-3 in the kernel body)."""
    lane_head = jnp.arange(D) // HEAD_DIM                      # head of value lane
    row_head = jnp.arange(C) // R                              # head of score lane
    key_tok = jnp.arange(C) % R                                # key token of score lane
    hmv = (row_head[:, None] == lane_head[None, :]).astype(jnp.float32)        # [C, D]
    amask = jnp.where((jnp.arange(R)[:, None] // SEQ) == (key_tok[None, :] // SEQ),
                      0.0, -1e30)                                              # [R, C]
    gsum = (row_head[:, None] == row_head[None, :]).astype(jnp.float32)        # [C, C]
    pool = (jnp.arange(B)[:, None] == (jnp.arange(R)[None, :] // SEQ)
            ).astype(jnp.float32) / SEQ                                        # [B, R]
    return hmv, amask, gsum, pool


def pack_params(p):
    # ---------- bf16 matrix slab (16-row alignment for clean bf16 tiles) ----------
    w = _Packer(align=16)
    w.add('w_all', jnp.concatenate([p['img_w'], p['ttl_w'], p['sum_w']], axis=0))
    # fused QKV; 1/sqrt(head_dim) folded into the q columns (and bq below)
    w.add('wqkv', jnp.concatenate([p['wq'] * SCALE, p['wk'], p['wv']], axis=1))
    w.add('ao_w', p['ao_w'])
    w.add('ff1_w', p['ff1_w'])
    w.add('ff2_w', p['ff2_w'])
    w.add('emb_w', p['emb_w'])
    w.add('cy_w_ch', p['cy_w'][:CH_EMB])          # cy_in = [ch_f | yr_f]
    w.add('cy_w_yr', p['cy_w'][CH_EMB:])
    w.add('dt_w', p['dt_w'])
    for nm, o, n in BRANCHES:                     # head first Linear split per branch
        w.add('h1_w_' + nm, p['h1_w'][o:o + n])

    # ---------- f32 slab: per-row bias, hoisted constants, 1-row params ----------
    f = _Packer(align=8)
    # per-(b,s)-row modality bias, replicated host-side (layout plumbing)
    f.add('b6', jnp.tile(jnp.stack([p['img_b'], p['ttl_b'], p['sum_b']], axis=0), (B, 1)))
    hmv, amask, gsum, pool = _attention_constants()
    f.add('hmv', hmv)
    f.add('amask', amask)
    f.add('gsum', gsum)
    f.add('pool', pool)
    f.add('bqkv', jnp.concatenate([p['bq'] * SCALE, p['bk'], p['bv']]))
    for n in ('ao_b', 'ln1_g', 'ln1_b', 'ff1_b', 'ff2_b', 'ln2_g', 'ln2_b',
              'yr_w', 'yr_b', 'yr_g', 'yr_beta',
              'cy_b', 'cy_g', 'cy_beta', 'dt_b', 'dt_g', 'dt_beta',
              'h1_b', 'h2_w', 'h2_b'):
        f.add(n, p[n])
    for nm, o, n in BRANCHES:                     # head LayerNorm split per branch
        f.add('hln_g_' + nm, p['hln_g'][o:o + n])
        f.add('hln_b_' + nm, p['hln_b'][o:o + n])

    return f.pack(jnp.float32), f.layout, w.pack(jnp.bfloat16), w.layout


def pack_inputs(img, ttl, smm, year, ch_onehot, date):
    """Merge ALL per-call data into one [16, 128] operand:
       rows 0..5: block-diagonal modality features, rows 8..9: metadata."""
    d = jnp.zeros((DATA_ROWS, LANES), jnp.float32)
    d = d.at[0:R:SEQ, :CLIP_DIM].set(img)
    d = d.at[1:R:SEQ, CLIP_DIM:CLIP_DIM + TXT_DIM].set(ttl)
    d = d.at[2:R:SEQ, CLIP_DIM + TXT_DIM:].set(smm)
    d = d.at[META_ROW0:META_ROW0 + B, :DATE_IN].set(date)
    d = d.at[META_ROW0:META_ROW0 + B, DATE_IN].set(year[:, 0])
    d = d.at[META_ROW0:META_ROW0 + B, 8:8 + NUM_CHANNELS].set(ch_onehot)
    return d


# ================================ fused kernel ================================
def make_forward(lay_f, lay_w, param_bytes):
    def kernel(pf_ref, pw_ref, d_ref, out_ref):
        def Wf(name):                 # f32 block: LN params / biases / constants
            r0, nr, nc = lay_f[name]
            return pf_ref[r0:r0 + nr, :nc]

        def Ww(name):                 # bf16 weight block
            r0, nr, nc = lay_w[name]
            return pw_ref[r0:r0 + nr, :nc]

        def dotf(a, b):               # tiny f32 matmul (constants / attention internals)
            return jnp.dot(a, b, preferred_element_type=jnp.float32)

        def mm(a, name):              # bf16 x bf16 MXU matmul, f32 accumulate
            return jnp.dot(a.astype(jnp.bfloat16), Ww(name),
                           preferred_element_type=jnp.float32)

        def ln(x, g, b):
            mu = jnp.mean(x, axis=-1, keepdims=True)
            var = jnp.mean(jnp.square(x - mu), axis=-1, keepdims=True)
            return (x - mu) * jax.lax.rsqrt(var + EPS) * g + b

        mod = d_ref[0:R, :]                                   # [R, 128]
        meta = d_ref[META_ROW0:META_ROW0 + B, :META_COLS]     # [B, 16]

        # ---- modality projections: ONE K=128 matmul builds the [R, D] sequence ----
        x = mm(mod, 'w_all') + Wf('b6')                       # [R, D]

        # ---- fusion transformer (1 post-norm layer, nhead=4, relu FFN, eval) ----
        qkv = mm(x, 'wqkv') + Wf('bqkv')                      # [R, 3D] (q pre-scaled)
        q = qkv[:, :D]
        k = qkv[:, D:2 * D]
        v = qkv[:, 2 * D:3 * D]

        # all 4 heads' scores side-by-side in one [R, C] tile (head h at lanes h*R)
        hmv = Wf('hmv')                                       # [C, D] head/lane mask
        kbd = jnp.concatenate([k] * NHEAD, axis=0) * hmv      # block-diag K operand
        sc = jax.lax.dot_general(q, kbd, (((1,), (1,)), ((), ())),
                                 preferred_element_type=jnp.float32)           # [R, C]
        sc = sc + Wf('amask')                                 # block-diag batch mask
        # per-row max over ALL heads: a per-row constant shift is softmax-invariant
        # within every 6-lane group and keeps exp() <= 1.
        sc = sc - jnp.max(sc, axis=-1, keepdims=True)
        pexp = jnp.exp(sc)
        denom = dotf(pexp, Wf('gsum'))                        # per-group sums, broadcast back
        pexp = pexp / denom                                   # exact softmax denominator
        vbd = jnp.concatenate([v] * NHEAD, axis=0) * hmv      # block-diag V operand
        ctx = dotf(pexp, vbd)                                 # [R, D]: head h in its own lanes

        attn = mm(ctx, 'ao_w') + Wf('ao_b')
        x = ln(x + attn, Wf('ln1_g'), Wf('ln1_b'))
        ff = jnp.maximum(mm(x, 'ff1_w') + Wf('ff1_b'), 0.0)
        ff = mm(ff, 'ff2_w') + Wf('ff2_b')
        x = ln(x + ff, Wf('ln2_g'), Wf('ln2_b'))

        # mean-pool the 3 modality tokens of each batch row (constant pooling matmul)
        pooled = dotf(Wf('pool'), x)                          # [B, D]

        # ---- metadata branches (Dropout == identity at inference) ----
        date = meta[:, :DATE_IN]
        year = meta[:, DATE_IN:DATE_IN + 1]
        onehot = meta[:, 8:8 + NUM_CHANNELS]

        # K=1 year projection as a VPU broadcast multiply (no matmul)
        yr_f = ln(jnp.maximum(year * Wf('yr_w') + Wf('yr_b'), 0.0),
                  Wf('yr_g'), Wf('yr_beta'))
        ch_f = mm(onehot, 'emb_w')                            # embedding lookup as one-hot matmul
        # cy_proj without building cat([ch_f, yr_f]): partial-matmul sum
        cy_pre = mm(ch_f, 'cy_w_ch') + mm(yr_f, 'cy_w_yr') + Wf('cy_b')
        cy_f = ln(jnp.maximum(cy_pre, 0.0), Wf('cy_g'), Wf('cy_beta'))
        dt_f = ln(jnp.maximum(mm(date, 'dt_w') + Wf('dt_b'), 0.0),
                  Wf('dt_g'), Wf('dt_beta'))

        # ---- head: LayerNorm over the 88-wide joint vector w/o materializing it ----
        pieces = (('pooled', pooled), ('yr', yr_f), ('ch', ch_f), ('cy', cy_f), ('date', dt_f))
        mu = sum(jnp.sum(t, axis=-1, keepdims=True) for _, t in pieces) * (1.0 / JOINT)
        var = sum(jnp.sum(jnp.square(t - mu), axis=-1, keepdims=True)
                  for _, t in pieces) * (1.0 / JOINT)
        inv = jax.lax.rsqrt(var + EPS)
        acc = jnp.zeros((B, HEAD_H), jnp.float32)
        for nm, t in pieces:                  # partial matmuls replace the joint concat
            nh = (t - mu) * inv * Wf('hln_g_' + nm) + Wf('hln_b_' + nm)
            acc = acc + mm(nh, 'h1_w_' + nm)
        hmid = jnp.maximum(acc + Wf('h1_b'), 0.0)                                # [B, HEAD_H]
        out = jnp.sum(hmid * Wf('h2_w'), axis=-1, keepdims=True) + Wf('h2_b')    # [B, 1]

        # lane-dense store; wrapper slices column 0
        out_ref[...] = jnp.broadcast_to(out, (B, OUT_LANES))

    # rough cost hints for the XLA scheduler (overhead-dominated kernel)
    flops = 2 * (R * PACK_IN * D + R * D * 3 * D + R * D * C + R * C * C + R * C * D
                 + R * D * D + 2 * R * D * 2 * D + B * R * D
                 + B * NUM_CHANNELS * CH_EMB + B * (CH_EMB + YEAR_P) * CY_H
                 + B * DATE_IN * DATE_P + B * JOINT * HEAD_H + B * HEAD_H)
    transcendentals = R * C + 2 * R + 5 * B + B
    bytes_accessed = param_bytes + 4 * (DATA_ROWS * LANES + B * OUT_LANES)

    vmem = pl.BlockSpec(memory_space=pltpu.MemorySpace.VMEM)
    call = pl.pallas_call(
        kernel,
        out_shape=jax.ShapeDtypeStruct((B, OUT_LANES), jnp.float32),
        in_specs=[vmem, vmem, vmem],
        out_specs=vmem,
        compiler_params=pltpu.CompilerParams(vmem_limit_bytes=4 * 1024 * 1024),
        cost_estimate=pl.CostEstimate(flops=int(flops),
                                      transcendentals=int(transcendentals),
                                      bytes_accessed=int(bytes_accessed)),
    )

    def forward(slab_f32, slab_bf16, data):
        return call(slab_f32, slab_bf16, data)[:, 0]   # .squeeze(1)

    return jax.jit(forward)


# ============================ parameters & reference ==========================
def init_params(key):
    ks = iter(jax.random.split(key, 48))

    def w(i, o, s=0.02):
        return jax.random.normal(next(ks), (i, o), jnp.float32) * s

    def b(o, s=0.02):
        return jax.random.normal(next(ks), (o,), jnp.float32) * s

    def g(o):
        return 1.0 + 0.1 * jax.random.normal(next(ks), (o,), jnp.float32)

    p = {}
    p['img_w'] = w(CLIP_DIM, D); p['img_b'] = b(D)
    p['ttl_w'] = w(TXT_DIM, D);  p['ttl_b'] = b(D)
    p['sum_w'] = w(TXT_DIM, D);  p['sum_b'] = b(D)
    p['wq'] = w(D, D); p['wk'] = w(D, D); p['wv'] = w(D, D)
    p['bq'] = b(D); p['bk'] = b(D); p['bv'] = b(D)
    p['ao_w'] = w(D, D); p['ao_b'] = b(D)
    p['ln1_g'] = g(D); p['ln1_b'] = b(D)
    p['ff1_w'] = w(D, 2 * D); p['ff1_b'] = b(2 * D)
    p['ff2_w'] = w(2 * D, D); p['ff2_b'] = b(D)
    p['ln2_g'] = g(D); p['ln2_b'] = b(D)
    p['yr_w'] = w(1, YEAR_P); p['yr_b'] = b(YEAR_P)
    p['yr_g'] = g(YEAR_P); p['yr_beta'] = b(YEAR_P)
    p['emb_w'] = w(NUM_CHANNELS, CH_EMB, 0.5)
    p['cy_w'] = w(CH_EMB + YEAR_P, CY_H); p['cy_b'] = b(CY_H)
    p['cy_g'] = g(CY_H); p['cy_beta'] = b(CY_H)
    p['dt_w'] = w(DATE_IN, DATE_P); p['dt_b'] = b(DATE_P)
    p['dt_g'] = g(DATE_P); p['dt_beta'] = b(DATE_P)
    p['hln_g'] = g(JOINT); p['hln_b'] = b(JOINT)
    p['h1_w'] = w(JOINT, HEAD_H); p['h1_b'] = b(HEAD_H)
    p['h2_w'] = jax.random.normal(next(ks), (HEAD_H,), jnp.float32) * 0.02
    p['h2_b'] = b(1)
    return p


def reference(p, img, ttl, smm, year, ch_idx, date):
    """Straightforward pure-JAX f32 re-implementation of the module's eval forward
    (concats, reshaped multi-head attention, exact softmax) for a meaningful
    cross-check of the optimized kernel math."""
    def ln(x, gg, bb):
        mu = x.mean(-1, keepdims=True)
        var = jnp.mean(jnp.square(x - mu), -1, keepdims=True)
        return (x - mu) / jnp.sqrt(var + EPS) * gg + bb

    img_f = img @ p['img_w'] + p['img_b']
    t_f = ttl @ p['ttl_w'] + p['ttl_b']
    s_f = smm @ p['sum_w'] + p['sum_b']
    x = jnp.stack([img_f, t_f, s_f], axis=1)                     # [B, 3, D]

    q = x @ p['wq'] + p['bq']; k = x @ p['wk'] + p['bk']; v = x @ p['wv'] + p['bv']
    qh = q.reshape(B, SEQ, NHEAD, HEAD_DIM).transpose(0, 2, 1, 3)
    kh = k.reshape(B, SEQ, NHEAD, HEAD_DIM).transpose(0, 2, 1, 3)
    vh = v.reshape(B, SEQ, NHEAD, HEAD_DIM).transpose(0, 2, 1, 3)
    sc = jnp.einsum('bhsd,bhtd->bhst', qh, kh) / math.sqrt(HEAD_DIM)
    pr = jax.nn.softmax(sc, axis=-1)
    ctx = jnp.einsum('bhst,bhtd->bhsd', pr, vh).transpose(0, 2, 1, 3).reshape(B, SEQ, D)
    attn = ctx @ p['ao_w'] + p['ao_b']
    x = ln(x + attn, p['ln1_g'], p['ln1_b'])
    ff = jax.nn.relu(x @ p['ff1_w'] + p['ff1_b']) @ p['ff2_w'] + p['ff2_b']
    x = ln(x + ff, p['ln2_g'], p['ln2_b'])
    pooled = x.mean(axis=1)

    yr_f = ln(jax.nn.relu(year @ p['yr_w'] + p['yr_b']), p['yr_g'], p['yr_beta'])
    ch_f = p['emb_w'][ch_idx]
    cy_f = ln(jax.nn.relu(jnp.concatenate([ch_f, yr_f], -1) @ p['cy_w'] + p['cy_b']),
              p['cy_g'], p['cy_beta'])
    dt_f = ln(jax.nn.relu(date @ p['dt_w'] + p['dt_b']), p['dt_g'], p['dt_beta'])

    joint = jnp.concatenate([pooled, yr_f, ch_f, cy_f, dt_f], -1)
    hmid = jax.nn.relu(ln(joint, p['hln_g'], p['hln_b']) @ p['h1_w'] + p['h1_b'])
    return hmid @ p['h2_w'] + p['h2_b'][0]


# ===================================== main ===================================
if __name__ == "__main__":
    key = jax.random.PRNGKey(0)
    k_inp, k_par = jax.random.split(key)
    ki = iter(jax.random.split(k_inp, 8))

    # synthetic encoder outputs + raw metadata batch
    img_feat = jax.random.normal(next(ki), (B, CLIP_DIM), jnp.float32)
    title_feat = jax.random.normal(next(ki), (B, TXT_DIM), jnp.float32)
    summary_feat = jax.random.normal(next(ki), (B, TXT_DIM), jnp.float32)
    year_norm = jax.random.normal(next(ki), (B, 1), jnp.float32)
    channel_idx = jax.random.randint(next(ki), (B,), 0, NUM_CHANNELS)
    date = jax.random.uniform(next(ki), (B, DATE_IN), jnp.float32, -1.0, 1.0)

    params = init_params(k_par)
    slab_f32, lay_f, slab_bf16, lay_w = pack_params(params)
    ch_onehot = jax.nn.one_hot(channel_idx, NUM_CHANNELS, dtype=jnp.float32)
    data_slab = pack_inputs(img_feat, title_feat, summary_feat,
                            year_norm, ch_onehot, date)

    param_bytes = int(slab_f32.size) * 4 + int(slab_bf16.size) * 2
    fwd = make_forward(lay_f, lay_w, param_bytes)
    out = jax.block_until_ready(fwd(slab_f32, slab_bf16, data_slab))

    ref = reference(params, img_feat, title_feat, summary_feat,
                    year_norm, channel_idx, date)

    assert out.shape == (B,)
    assert bool(jnp.all(jnp.isfinite(out)))
    # bf16 matmul weights (per perf review) introduce ~1e-3-level differences vs
    # the f32 reference; LN params, statistics and softmax stay exact f32.
    assert jnp.allclose(out, ref, atol=5e-3, rtol=5e-3), (out, ref)
    print("KERNEL_OK")
</pallas_src>

<mosaic_0001>
module attributes {stable_mosaic.version = 11 : i64} {
  func.func @kernel(%arg0: memref<104x128xf32, #tpu.memory_space<vmem>>, %arg1: memref<448x128xbf16, #tpu.memory_space<vmem>>, %arg2: memref<16x128xf32, #tpu.memory_space<vmem>>, %arg3: memref<2x128xf32, #tpu.memory_space<vmem>>) attributes {dimension_semantics = [], scalar_prefetch = 0 : i64, scratch_operands = 0 : i64, tpu.core_type = #tpu.core_type<tc>} {
    %c0 = arith.constant 0 : index
    %c0_0 = arith.constant 0 : index
    %0 = vector.load %arg2[%c0, %c0_0] : memref<16x128xf32, #tpu.memory_space<vmem>>, vector<6x128xf32>
    %c8 = arith.constant 8 : index
    %c0_1 = arith.constant 0 : index
    %1 = vector.load %arg2[%c8, %c0_1] : memref<16x128xf32, #tpu.memory_space<vmem>>, vector<2x16xf32>
    %2 = arith.truncf %0 : vector<6x128xf32> to vector<6x128xbf16>
    %c0_2 = arith.constant 0 : index
    %c0_3 = arith.constant 0 : index
    %3 = vector.load %arg1[%c0_2, %c0_3] : memref<448x128xbf16, #tpu.memory_space<vmem>>, vector<128x32xbf16>
    %cst = arith.constant dense<0.000000e+00> : vector<6x32xf32>
    %4 = tpu.matmul %2, %3, %cst {dimension_numbers = #tpu.dot_dimension_numbers<[1], [0], [0], [1], [0, 0, 1, 1], [], []>} : vector<6x128xbf16>, vector<128x32xbf16>, vector<6x32xf32> -> vector<6x32xf32>
    %c0_4 = arith.constant 0 : index
    %c0_5 = arith.constant 0 : index
    %5 = vector.load %arg0[%c0_4, %c0_5] : memref<104x128xf32, #tpu.memory_space<vmem>>, vector<6x32xf32>
    %6 = arith.addf %4, %5 : vector<6x32xf32>
    %7 = arith.truncf %6 : vector<6x32xf32> to vector<6x32xbf16>
    %c128 = arith.constant 128 : index
    %c0_6 = arith.constant 0 : index
    %8 = vector.load %arg1[%c128, %c0_6] : memref<448x128xbf16, #tpu.memory_space<vmem>>, vector<32x96xbf16>
    %cst_7 = arith.constant dense<0.000000e+00> : vector<6x96xf32>
    %9 = tpu.matmul %7, %8, %cst_7 {dimension_numbers = #tpu.dot_dimension_numbers<[1], [0], [0], [1], [0, 0, 1, 1], [], []>} : vector<6x32xbf16>, vector<32x96xbf16>, vector<6x96xf32> -> vector<6x96xf32>
    %c66 = arith.constant 66 : index
    %c0_8 = arith.constant 0 : index
    %10 = vector.load %arg0[%c66, %c0_8] : memref<104x128xf32, #tpu.memory_space<vmem>>, vector<1x96xf32>
    %11 = vector.broadcast %10 : vector<1x96xf32> to vector<6x96xf32>
    %12 = arith.addf %9, %11 : vector<6x96xf32>
    %13 = vector.extract_strided_slice %12 {offsets = [0, 0], sizes = [6, 32], strides = [1, 1]} : vector<6x96xf32> to vector<6x32xf32>
    %14 = vector.extract_strided_slice %12 {offsets = [0, 32], sizes = [6, 32], strides = [1, 1]} : vector<6x96xf32> to vector<6x32xf32>
    %15 = vector.extract_strided_slice %12 {offsets = [0, 64], sizes = [6, 32], strides = [1, 1]} : vector<6x96xf32> to vector<6x32xf32>
    %c8_9 = arith.constant 8 : index
    %c0_10 = arith.constant 0 : index
    %16 = vector.load %arg0[%c8_9, %c0_10] : memref<104x128xf32, #tpu.memory_space<vmem>>, vector<24x32xf32>
    %17 = tpu.concatenate %14, %14, %14, %14 in 0 : vector<6x32xf32>, vector<6x32xf32>, vector<6x32xf32>, vector<6x32xf32> -> vector<24x32xf32>
    %18 = arith.mulf %17, %16 : vector<24x32xf32>
    %cst_11 = arith.constant dense<0.000000e+00> : vector<6x24xf32>
    %19 = tpu.matmul %13, %18, %cst_11 {dimension_numbers = #tpu.dot_dimension_numbers<[1], [1], [0], [0], [0, 0, 1, 0], [], []>} : vector<6x32xf32>, vector<24x32xf32>, vector<6x24xf32> -> vector<6x24xf32>
    %c32 = arith.constant 32 : index
    %c0_12 = arith.constant 0 : index
    %20 = vector.load %arg0[%c32, %c0_12] : memref<104x128xf32, #tpu.memory_space<vmem>>, vector<6x24xf32>
    %21 = arith.addf %19, %20 : vector<6x24xf32>
    %cst_13 = arith.constant dense<0xFF800000> : vector<6xf32>
    %22 = vector.multi_reduction <maximumf>, %21, %cst_13 [1] : vector<6x24xf32> to vector<6xf32>
    %23 = vector.shape_cast %22 : vector<6xf32> to vector<6x1xf32>
    %24 = vector.broadcast %23 : vector<6x1xf32> to vector<6x24xf32>
    %25 = arith.subf %21, %24 : vector<6x24xf32>
    %26 = math.exp %25 : vector<6x24xf32>
    %c40 = arith.constant 40 : index
    %c0_14 = arith.constant 0 : index
    %27 = vector.load %arg0[%c40, %c0_14] : memref<104x128xf32, #tpu.memory_space<vmem>>, vector<24x24xf32>
    %cst_15 = arith.constant dense<0.000000e+00> : vector<6x24xf32>
    %28 = tpu.matmul %26, %27, %cst_15 {dimension_numbers = #tpu.dot_dimension_numbers<[1], [0], [0], [1], [0, 0, 1, 1], [], []>} : vector<6x24xf32>, vector<24x24xf32>, vector<6x24xf32> -> vector<6x24xf32>
    %29 = arith.divf %26, %28 : vector<6x24xf32>
    %30 = tpu.concatenate %15, %15, %15, %15 in 0 : vector<6x32xf32>, vector<6x32xf32>, vector<6x32xf32>, vector<6x32xf32> -> vector<24x32xf32>
    %31 = arith.mulf %30, %16 : vector<24x32xf32>
    %cst_16 = arith.constant dense<0.000000e+00> : vector<6x32xf32>
    %32 = tpu.matmul %29, %31, %cst_16 {dimension_numbers = #tpu.dot_dimension_numbers<[1], [0], [0], [1], [0, 0, 1, 1], [], []>} : vector<6x24xf32>, vector<24x32xf32>, vector<6x32xf32> -> vector<6x32xf32>
    %33 = arith.truncf %32 : vector<6x32xf32> to vector<6x32xbf16>
    %c160 = arith.constant 160 : index
    %c0_17 = arith.constant 0 : index
    %34 = vector.load %arg1[%c160, %c0_17] : memref<448x128xbf16, #tpu.memory_space<vmem>>, vector<32x32xbf16>
    %cst_18 = arith.constant dense<0.000000e+00> : vector<6x32xf32>
    %35 = tpu.matmul %33, %34, %cst_18 {dimension_numbers = #tpu.dot_dimension_numbers<[1], [0], [0], [1], [0, 0, 1, 1], [], []>} : vector<6x32xbf16>, vector<32x32xbf16>, vector<6x32xf32> -> vector<6x32xf32>
    %c67 = arith.constant 67 : index
    %c0_19 = arith.constant 0 : index
    %36 = vector.load %arg0[%c67, %c0_19] : memref<104x128xf32, #tpu.memory_space<vmem>>, vector<1x32xf32>
    %37 = vector.broadcast %36 : vector<1x32xf32> to vector<6x32xf32>
    %38 = arith.addf %35, %37 : vector<6x32xf32>
    %39 = arith.addf %6, %38 : vector<6x32xf32>
    %c68 = arith.constant 68 : index
    %c0_20 = arith.constant 0 : index
    %40 = vector.load %arg0[%c68, %c0_20] : memref<104x128xf32, #tpu.memory_space<vmem>>, vector<1x32xf32>
    %c69 = arith.constant 69 : index
    %c0_21 = arith.constant 0 : index
    %41 = vector.load %arg0[%c69, %c0_21] : memref<104x128xf32, #tpu.memory_space<vmem>>, vector<1x32xf32>
    %cst_22 = arith.constant dense<0.000000e+00> : vector<6xf32>
    %42 = vector.multi_reduction <add>, %39, %cst_22 [1] : vector<6x32xf32> to vector<6xf32>
    %43 = vector.shape_cast %42 : vector<6xf32> to vector<6x1xf32>
    %cst_23 = arith.constant 3.200000e+01 : f32
    %44 = vector.broadcast %cst_23 : f32 to vector<6x1xf32>
    %45 = arith.divf %43, %44 : vector<6x1xf32>
    %46 = vector.broadcast %45 : vector<6x1xf32> to vector<6x32xf32>
    %47 = arith.subf %39, %46 : vector<6x32xf32>
    %48 = arith.mulf %47, %47 : vector<6x32xf32>
    %cst_24 = arith.constant dense<0.000000e+00> : vector<6xf32>
    %49 = vector.multi_reduction <add>, %48, %cst_24 [1] : vector<6x32xf32> to vector<6xf32>
    %50 = vector.shape_cast %49 : vector<6xf32> to vector<6x1xf32>
    %cst_25 = arith.constant 3.200000e+01 : f32
    %51 = vector.broadcast %cst_25 : f32 to vector<6x1xf32>
    %52 = arith.divf %50, %51 : vector<6x1xf32>
    %53 = vector.broadcast %45 : vector<6x1xf32> to vector<6x32xf32>
    %54 = arith.subf %39, %53 : vector<6x32xf32>
    %cst_26 = arith.constant 9.99999974E-6 : f32
    %55 = vector.broadcast %cst_26 : f32 to vector<6x1xf32>
    %56 = arith.addf %52, %55 : vector<6x1xf32>
    %57 = math.rsqrt %56 : vector<6x1xf32>
    %58 = vector.broadcast %57 : vector<6x1xf32> to vector<6x32xf32>
    %59 = arith.mulf %54, %58 : vector<6x32xf32>
    %60 = vector.broadcast %40 : vector<1x32xf32> to vector<6x32xf32>
    %61 = arith.mulf %59, %60 : vector<6x32xf32>
    %62 = vector.broadcast %41 : vector<1x32xf32> to vector<6x32xf32>
    %63 = arith.addf %61, %62 : vector<6x32xf32>
    %64 = arith.truncf %63 : vector<6x32xf32> to vector<6x32xbf16>
    %c192 = arith.constant 192 : index
    %c0_27 = arith.constant 0 : index
    %65 = vector.load %arg1[%c192, %c0_27] : memref<448x128xbf16, #tpu.memory_space<vmem>>, vector<32x64xbf16>
    %cst_28 = arith.constant dense<0.000000e+00> : vector<6x64xf32>
    %66 = tpu.matmul %64, %65, %cst_28 {dimension_numbers = #tpu.dot_dimension_numbers<[1], [0], [0], [1], [0, 0, 1, 1], [], []>} : vector<6x32xbf16>, vector<32x64xbf16>, vector<6x64xf32> -> vector<6x64xf32>
    %c70 = arith.constant 70 : index
    %c0_29 = arith.constant 0 : index
    %67 = vector.load %arg0[%c70, %c0_29] : memref<104x128xf32, #tpu.memory_space<vmem>>, vector<1x64xf32>
    %68 = vector.broadcast %67 : vector<1x64xf32> to vector<6x64xf32>
    %69 = arith.addf %66, %68 : vector<6x64xf32>
    %cst_30 = arith.constant 0.000000e+00 : f32
    %70 = vector.broadcast %cst_30 : f32 to vector<6x64xf32>
    %71 = arith.maximumf %69, %70 : vector<6x64xf32>
    %72 = arith.truncf %71 : vector<6x64xf32> to vector<6x64xbf16>
    %c224 = arith.constant 224 : index
    %c0_31 = arith.constant 0 : index
    %73 = vector.load %arg1[%c224, %c0_31] : memref<448x128xbf16, #tpu.memory_space<vmem>>, vector<64x32xbf16>
    %cst_32 = arith.constant dense<0.000000e+00> : vector<6x32xf32>
    %74 = tpu.matmul %72, %73, %cst_32 {dimension_numbers = #tpu.dot_dimension_numbers<[1], [0], [0], [1], [0, 0, 1, 1], [], []>} : vector<6x64xbf16>, vector<64x32xbf16>, vector<6x32xf32> -> vector<6x32xf32>
    %c71 = arith.constant 71 : index
    %c0_33 = arith.constant 0 : index
    %75 = vector.load %arg0[%c71, %c0_33] : memref<104x128xf32, #tpu.memory_space<vmem>>, vector<1x32xf32>
    %76 = vector.broadcast %75 : vector<1x32xf32> to vector<6x32xf32>
    %77 = arith.addf %74, %76 : vector<6x32xf32>
    %78 = arith.addf %63, %77 : vector<6x32xf32>
    %c72 = arith.constant 72 : index
    %c0_34 = arith.constant 0 : index
    %79 = vector.load %arg0[%c72, %c0_34] : memref<104x128xf32, #tpu.memory_space<vmem>>, vector<1x32xf32>
    %c73 = arith.constant 73 : index
    %c0_35 = arith.constant 0 : index
    %80 = vector.load %arg0[%c73, %c0_35] : memref<104x128xf32, #tpu.memory_space<vmem>>, vector<1x32xf32>
    %cst_36 = arith.constant dense<0.000000e+00> : vector<6xf32>
    %81 = vector.multi_reduction <add>, %78, %cst_36 [1] : vector<6x32xf32> to vector<6xf32>
    %82 = vector.shape_cast %81 : vector<6xf32> to vector<6x1xf32>
    %cst_37 = arith.constant 3.200000e+01 : f32
    %83 = vector.broadcast %cst_37 : f32 to vector<6x1xf32>
    %84 = arith.divf %82, %83 : vector<6x1xf32>
    %85 = vector.broadcast %84 : vector<6x1xf32> to vector<6x32xf32>
    %86 = arith.subf %78, %85 : vector<6x32xf32>
    %87 = arith.mulf %86, %86 : vector<6x32xf32>
    %cst_38 = arith.constant dense<0.000000e+00> : vector<6xf32>
    %88 = vector.multi_reduction <add>, %87, %cst_38 [1] : vector<6x32xf32> to vector<6xf32>
    %89 = vector.shape_cast %88 : vector<6xf32> to vector<6x1xf32>
    %cst_39 = arith.constant 3.200000e+01 : f32
    %90 = vector.broadcast %cst_39 : f32 to vector<6x1xf32>
    %91 = arith.divf %89, %90 : vector<6x1xf32>
    %92 = vector.broadcast %84 : vector<6x1xf32> to vector<6x32xf32>
    %93 = arith.subf %78, %92 : vector<6x32xf32>
    %cst_40 = arith.constant 9.99999974E-6 : f32
    %94 = vector.broadcast %cst_40 : f32 to vector<6x1xf32>
    %95 = arith.addf %91, %94 : vector<6x1xf32>
    %96 = math.rsqrt %95 : vector<6x1xf32>
    %97 = vector.broadcast %96 : vector<6x1xf32> to vector<6x32xf32>
    %98 = arith.mulf %93, %97 : vector<6x32xf32>
    %99 = vector.broadcast %79 : vector<1x32xf32> to vector<6x32xf32>
    %100 = arith.mulf %98, %99 : vector<6x32xf32>
    %101 = vector.broadcast %80 : vector<1x32xf32> to vector<6x32xf32>
    %102 = arith.addf %100, %101 : vector<6x32xf32>
    %c64 = arith.constant 64 : index
    %c0_41 = arith.constant 0 : index
    %103 = vector.load %arg0[%c64, %c0_41] : memref<104x128xf32, #tpu.memory_space<vmem>>, vector<2x6xf32>
    %cst_42 = arith.constant dense<0.000000e+00> : vector<2x32xf32>
    %104 = tpu.matmul %103, %102, %cst_42 {dimension_numbers = #tpu.dot_dimension_numbers<[1], [0], [0], [1], [0, 0, 1, 1], [], []>} : vector<2x6xf32>, vector<6x32xf32>, vector<2x32xf32> -> vector<2x32xf32>
    %105 = vector.extract_strided_slice %1 {offsets = [0, 0], sizes = [2, 6], strides = [1, 1]} : vector<2x16xf32> to vector<2x6xf32>
    %106 = vector.extract_strided_slice %1 {offsets = [0, 6], sizes = [2, 1], strides = [1, 1]} : vector<2x16xf32> to vector<2x1xf32>
    %107 = vector.extract_strided_slice %1 {offsets = [0, 8], sizes = [2, 8], strides = [1, 1]} : vector<2x16xf32> to vector<2x8xf32>
    %c74 = arith.constant 74 : index
    %c0_43 = arith.constant 0 : index
    %108 = vector.load %arg0[%c74, %c0_43] : memref<104x128xf32, #tpu.memory_space<vmem>>, vector<1x8xf32>
    %109 = vector.broadcast %106 : vector<2x1xf32> to vector<2x8xf32>
    %110 = vector.broadcast %108 : vector<1x8xf32> to vector<2x8xf32>
    %111 = arith.mulf %109, %110 : vector<2x8xf32>
    %c75 = arith.constant 75 : index
    %c0_44 = arith.constant 0 : index
    %112 = vector.load %arg0[%c75, %c0_44] : memref<104x128xf32, #tpu.memory_space<vmem>>, vector<1x8xf32>
    %113 = vector.broadcast %112 : vector<1x8xf32> to vector<2x8xf32>
    %114 = arith.addf %111, %113 : vector<2x8xf32>
    %cst_45 = arith.constant 0.000000e+00 : f32
    %115 = vector.broadcast %cst_45 : f32 to vector<2x8xf32>
    %116 = arith.maximumf %114, %115 : vector<2x8xf32>
    %c76 = arith.constant 76 : index
    %c0_46 = arith.constant 0 : index
    %117 = vector.load %arg0[%c76, %c0_46] : memref<104x128xf32, #tpu.memory_space<vmem>>, vector<1x8xf32>
    %c77 = arith.constant 77 : index
    %c0_47 = arith.constant 0 : index
    %118 = vector.load %arg0[%c77, %c0_47] : memref<104x128xf32, #tpu.memory_space<vmem>>, vector<1x8xf32>
    %cst_48 = arith.constant dense<0.000000e+00> : vector<2xf32>
    %119 = vector.multi_reduction <add>, %116, %cst_48 [1] : vector<2x8xf32> to vector<2xf32>
    %120 = vector.shape_cast %119 : vector<2xf32> to vector<2x1xf32>
    %cst_49 = arith.constant 8.000000e+00 : f32
    %121 = vector.broadcast %cst_49 : f32 to vector<2x1xf32>
    %122 = arith.divf %120, %121 : vector<2x1xf32>
    %123 = vector.broadcast %122 : vector<2x1xf32> to vector<2x8xf32>
    %124 = arith.subf %116, %123 : vector<2x8xf32>
    %125 = arith.mulf %124, %124 : vector<2x8xf32>
    %cst_50 = arith.constant dense<0.000000e+00> : vector<2xf32>
    %126 = vector.multi_reduction <add>, %125, %cst_50 [1] : vector<2x8xf32> to vector<2xf32>
    %127 = vector.shape_cast %126 : vector<2xf32> to vector<2x1xf32>
    %cst_51 = arith.constant 8.000000e+00 : f32
    %128 = vector.broadcast %cst_51 : f32 to vector<2x1xf32>
    %129 = arith.divf %127, %128 : vector<2x1xf32>
    %130 = vector.broadcast %122 : vector<2x1xf32> to vector<2x8xf32>
    %131 = arith.subf %116, %130 : vector<2x8xf32>
    %cst_52 = arith.constant 9.99999974E-6 : f32
    %132 = vector.broadcast %cst_52 : f32 to vector<2x1xf32>
    %133 = arith.addf %129, %132 : vector<2x1xf32>
    %134 = math.rsqrt %133 : vector<2x1xf32>
    %135 = vector.broadcast %134 : vector<2x1xf32> to vector<2x8xf32>
    %136 = arith.mulf %131, %135 : vector<2x8xf32>
    %137 = vector.broadcast %117 : vector<1x8xf32> to vector<2x8xf32>
    %138 = arith.mulf %136, %137 : vector<2x8xf32>
    %139 = vector.broadcast %118 : vector<1x8xf32> to vector<2x8xf32>
    %140 = arith.addf %138, %139 : vector<2x8xf32>
    %141 = arith.truncf %107 : vector<2x8xf32> to vector<2x8xbf16>
    %c288 = arith.constant 288 : index
    %c0_53 = arith.constant 0 : index
    %142 = vector.load %arg1[%c288, %c0_53] : memref<448x128xbf16, #tpu.memory_space<vmem>>, vector<8x16xbf16>
    %cst_54 = arith.constant dense<0.000000e+00> : vector<2x16xf32>
    %143 = tpu.matmul %141, %142, %cst_54 {dimension_numbers = #tpu.dot_dimension_numbers<[1], [0], [0], [1], [0, 0, 1, 1], [], []>} : vector<2x8xbf16>, vector<8x16xbf16>, vector<2x16xf32> -> vector<2x16xf32>
    %144 = arith.truncf %143 : vector<2x16xf32> to vector<2x16xbf16>
    %c304 = arith.constant 304 : index
    %c0_55 = arith.constant 0 : index
    %145 = vector.load %arg1[%c304, %c0_55] : memref<448x128xbf16, #tpu.memory_space<vmem>>, vector<16x16xbf16>
    %cst_56 = arith.constant dense<0.000000e+00> : vector<2x16xf32>
    %146 = tpu.matmul %144, %145, %cst_56 {dimension_numbers = #tpu.dot_dimension_numbers<[1], [0], [0], [1], [0, 0, 1, 1], [], []>} : vector<2x16xbf16>, vector<16x16xbf16>, vector<2x16xf32> -> vector<2x16xf32>
    %147 = arith.truncf %140 : vector<2x8xf32> to vector<2x8xbf16>
    %c320 = arith.constant 320 : index
    %c0_57 = arith.constant 0 : index
    %148 = vector.load %arg1[%c320, %c0_57] : memref<448x128xbf16, #tpu.memory_space<vmem>>, vector<8x16xbf16>
    %cst_58 = arith.constant dense<0.000000e+00> : vector<2x16xf32>
    %149 = tpu.matmul %147, %148, %cst_58 {dimension_numbers = #tpu.dot_dimension_numbers<[1], [0], [0], [1], [0, 0, 1, 1], [], []>} : vector<2x8xbf16>, vector<8x16xbf16>, vector<2x16xf32> -> vector<2x16xf32>
    %150 = arith.addf %146, %149 : vector<2x16xf32>
    %c78 = arith.constant 78 : index
    %c0_59 = arith.constant 0 : index
    %151 = vector.load %arg0[%c78, %c0_59] : memref<104x128xf32, #tpu.memory_space<vmem>>, vector<1x16xf32>
    %152 = vector.broadcast %151 : vector<1x16xf32> to vector<2x16xf32>
    %153 = arith.addf %150, %152 : vector<2x16xf32>
    %cst_60 = arith.constant 0.000000e+00 : f32
    %154 = vector.broadcast %cst_60 : f32 to vector<2x16xf32>
    %155 = arith.maximumf %153, %154 : vector<2x16xf32>
    %c79 = arith.constant 79 : index
    %c0_61 = arith.constant 0 : index
    %156 = vector.load %arg0[%c79, %c0_61] : memref<104x128xf32, #tpu.memory_space<vmem>>, vector<1x16xf32>
    %c80 = arith.constant 80 : index
    %c0_62 = arith.constant 0 : index
    %157 = vector.load %arg0[%c80, %c0_62] : memref<104x128xf32, #tpu.memory_space<vmem>>, vector<1x16xf32>
    %cst_63 = arith.constant dense<0.000000e+00> : vector<2xf32>
    %158 = vector.multi_reduction <add>, %155, %cst_63 [1] : vector<2x16xf32> to vector<2xf32>
    %159 = vector.shape_cast %158 : vector<2xf32> to vector<2x1xf32>
    %cst_64 = arith.constant 1.600000e+01 : f32
    %160 = vector.broadcast %cst_64 : f32 to vector<2x1xf32>
    %161 = arith.divf %159, %160 : vector<2x1xf32>
    %162 = vector.broadcast %161 : vector<2x1xf32> to vector<2x16xf32>
    %163 = arith.subf %155, %162 : vector<2x16xf32>
    %164 = arith.mulf %163, %163 : vector<2x16xf32>
    %cst_65 = arith.constant dense<0.000000e+00> : vector<2xf32>
    %165 = vector.multi_reduction <add>, %164, %cst_65 [1] : vector<2x16xf32> to vector<2xf32>
    %166 = vector.shape_cast %165 : vector<2xf32> to vector<2x1xf32>
    %cst_66 = arith.constant 1.600000e+01 : f32
    %167 = vector.broadcast %cst_66 : f32 to vector<2x1xf32>
    %168 = arith.divf %166, %167 : vector<2x1xf32>
    %169 = vector.broadcast %161 : vector<2x1xf32> to vector<2x16xf32>
    %170 = arith.subf %155, %169 : vector<2x16xf32>
    %cst_67 = arith.constant 9.99999974E-6 : f32
    %171 = vector.broadcast %cst_67 : f32 to vector<2x1xf32>
    %172 = arith.addf %168, %171 : vector<2x1xf32>
    %173 = math.rsqrt %172 : vector<2x1xf32>
    %174 = vector.broadcast %173 : vector<2x1xf32> to vector<2x16xf32>
    %175 = arith.mulf %170, %174 : vector<2x16xf32>
    %176 = vector.broadcast %156 : vector<1x16xf32> to vector<2x16xf32>
    %177 = arith.mulf %175, %176 : vector<2x16xf32>
    %178 = vector.broadcast %157 : vector<1x16xf32> to vector<2x16xf32>
    %179 = arith.addf %177, %178 : vector<2x16xf32>
    %180 = arith.truncf %105 : vector<2x6xf32> to vector<2x6xbf16>
    %c336 = arith.constant 336 : index
    %c0_68 = arith.constant 0 : index
    %181 = vector.load %arg1[%c336, %c0_68] : memref<448x128xbf16, #tpu.memory_space<vmem>>, vector<6x16xbf16>
    %cst_69 = arith.constant dense<0.000000e+00> : vector<2x16xf32>
    %182 = tpu.matmul %180, %181, %cst_69 {dimension_numbers = #tpu.dot_dimension_numbers<[1], [0], [0], [1], [0, 0, 1, 1], [], []>} : vector<2x6xbf16>, vector<6x16xbf16>, vector<2x16xf32> -> vector<2x16xf32>
    %c81 = arith.constant 81 : index
    %c0_70 = arith.constant 0 : index
    %183 = vector.load %arg0[%c81, %c0_70] : memref<104x128xf32, #tpu.memory_space<vmem>>, vector<1x16xf32>
    %184 = vector.broadcast %183 : vector<1x16xf32> to vector<2x16xf32>
    %185 = arith.addf %182, %184 : vector<2x16xf32>
    %cst_71 = arith.constant 0.000000e+00 : f32
    %186 = vector.broadcast %cst_71 : f32 to vector<2x16xf32>
    %187 = arith.maximumf %185, %186 : vector<2x16xf32>
    %c82 = arith.constant 82 : index
    %c0_72 = arith.constant 0 : index
    %188 = vector.load %arg0[%c82, %c0_72] : memref<104x128xf32, #tpu.memory_space<vmem>>, vector<1x16xf32>
    %c83 = arith.constant 83 : index
    %c0_73 = arith.constant 0 : index
    %189 = vector.load %arg0[%c83, %c0_73] : memref<104x128xf32, #tpu.memory_space<vmem>>, vector<1x16xf32>
    %cst_74 = arith.constant dense<0.000000e+00> : vector<2xf32>
    %190 = vector.multi_reduction <add>, %187, %cst_74 [1] : vector<2x16xf32> to vector<2xf32>
    %191 = vector.shape_cast %190 : vector<2xf32> to vector<2x1xf32>
    %cst_75 = arith.constant 1.600000e+01 : f32
    %192 = vector.broadcast %cst_75 : f32 to vector<2x1xf32>
    %193 = arith.divf %191, %192 : vector<2x1xf32>
    %194 = vector.broadcast %193 : vector<2x1xf32> to vector<2x16xf32>
    %195 = arith.subf %187, %194 : vector<2x16xf32>
    %196 = arith.mulf %195, %195 : vector<2x16xf32>
    %cst_76 = arith.constant dense<0.000000e+00> : vector<2xf32>
    %197 = vector.multi_reduction <add>, %196, %cst_76 [1] : vector<2x16xf32> to vector<2xf32>
    %198 = vector.shape_cast %197 : vector<2xf32> to vector<2x1xf32>
    %cst_77 = arith.constant 1.600000e+01 : f32
    %199 = vector.broadcast %cst_77 : f32 to vector<2x1xf32>
    %200 = arith.divf %198, %199 : vector<2x1xf32>
    %201 = vector.broadcast %193 : vector<2x1xf32> to vector<2x16xf32>
    %202 = arith.subf %187, %201 : vector<2x16xf32>
    %cst_78 = arith.constant 9.99999974E-6 : f32
    %203 = vector.broadcast %cst_78 : f32 to vector<2x1xf32>
    %204 = arith.addf %200, %203 : vector<2x1xf32>
    %205 = math.rsqrt %204 : vector<2x1xf32>
    %206 = vector.broadcast %205 : vector<2x1xf32> to vector<2x16xf32>
    %207 = arith.mulf %202, %206 : vector<2x16xf32>
    %208 = vector.broadcast %188 : vector<1x16xf32> to vector<2x16xf32>
    %209 = arith.mulf %207, %208 : vector<2x16xf32>
    %210 = vector.broadcast %189 : vector<1x16xf32> to vector<2x16xf32>
    %211 = arith.addf %209, %210 : vector<2x16xf32>
    %cst_79 = arith.constant dense<0.000000e+00> : vector<2xf32>
    %212 = vector.multi_reduction <add>, %104, %cst_79 [1] : vector<2x32xf32> to vector<2xf32>
    %213 = vector.shape_cast %212 : vector<2xf32> to vector<2x1xf32>
    %cst_80 = arith.constant 0.000000e+00 : f32
    %214 = vector.broadcast %cst_80 : f32 to vector<2x1xf32>
    %215 = arith.addf %214, %213 : vector<2x1xf32>
    %cst_81 = arith.constant dense<0.000000e+00> : vector<2xf32>
    %216 = vector.multi_reduction <add>, %140, %cst_81 [1] : vector<2x8xf32> to vector<2xf32>
    %217 = vector.shape_cast %216 : vector<2xf32> to vector<2x1xf32>
    %218 = arith.addf %215, %217 : vector<2x1xf32>
    %cst_82 = arith.constant dense<0.000000e+00> : vector<2xf32>
    %219 = vector.multi_reduction <add>, %143, %cst_82 [1] : vector<2x16xf32> to vector<2xf32>
    %220 = vector.shape_cast %219 : vector<2xf32> to vector<2x1xf32>
    %221 = arith.addf %218, %220 : vector<2x1xf32>
    %cst_83 = arith.constant dense<0.000000e+00> : vector<2xf32>
    %222 = vector.multi_reduction <add>, %179, %cst_83 [1] : vector<2x16xf32> to vector<2xf32>
    %223 = vector.shape_cast %222 : vector<2xf32> to vector<2x1xf32>
    %224 = arith.addf %221, %223 : vector<2x1xf32>
    %cst_84 = arith.constant dense<0.000000e+00> : vector<2xf32>
    %225 = vector.multi_reduction <add>, %211, %cst_84 [1] : vector<2x16xf32> to vector<2xf32>
    %226 = vector.shape_cast %225 : vector<2xf32> to vector<2x1xf32>
    %227 = arith.addf %224, %226 : vector<2x1xf32>
    %cst_85 = arith.constant 0.0113636367 : f32
    %228 = vector.broadcast %cst_85 : f32 to vector<2x1xf32>
    %229 = arith.mulf %227, %228 : vector<2x1xf32>
    %230 = vector.broadcast %229 : vector<2x1xf32> to vector<2x32xf32>
    %231 = arith.subf %104, %230 : vector<2x32xf32>
    %232 = arith.mulf %231, %231 : vector<2x32xf32>
    %cst_86 = arith.constant dense<0.000000e+00> : vector<2xf32>
    %233 = vector.multi_reduction <add>, %232, %cst_86 [1] : vector<2x32xf32> to vector<2xf32>
    %234 = vector.shape_cast %233 : vector<2xf32> to vector<2x1xf32>
    %cst_87 = arith.constant 0.000000e+00 : f32
    %235 = vector.broadcast %cst_87 : f32 to vector<2x1xf32>
    %236 = arith.addf %235, %234 : vector<2x1xf32>
    %237 = vector.broadcast %229 : vector<2x1xf32> to vector<2x8xf32>
    %238 = arith.subf %140, %237 : vector<2x8xf32>
    %239 = arith.mulf %238, %238 : vector<2x8xf32>
    %cst_88 = arith.constant dense<0.000000e+00> : vector<2xf32>
    %240 = vector.multi_reduction <add>, %239, %cst_88 [1] : vector<2x8xf32> to vector<2xf32>
    %241 = vector.shape_cast %240 : vector<2xf32> to vector<2x1xf32>
    %242 = arith.addf %236, %241 : vector<2x1xf32>
    %243 = vector.broadcast %229 : vector<2x1xf32> to vector<2x16xf32>
    %244 = arith.subf %143, %243 : vector<2x16xf32>
    %245 = arith.mulf %244, %244 : vector<2x16xf32>
    %cst_89 = arith.constant dense<0.000000e+00> : vector<2xf32>
    %246 = vector.multi_reduction <add>, %245, %cst_89 [1] : vector<2x16xf32> to vector<2xf32>
    %247 = vector.shape_cast %246 : vector<2xf32> to vector<2x1xf32>
    %248 = arith.addf %242, %247 : vector<2x1xf32>
    %249 = vector.broadcast %229 : vector<2x1xf32> to vector<2x16xf32>
    %250 = arith.subf %179, %249 : vector<2x16xf32>
    %251 = arith.mulf %250, %250 : vector<2x16xf32>
    %cst_90 = arith.constant dense<0.000000e+00> : vector<2xf32>
    %252 = vector.multi_reduction <add>, %251, %cst_90 [1] : vector<2x16xf32> to vector<2xf32>
    %253 = vector.shape_cast %252 : vector<2xf32> to vector<2x1xf32>
    %254 = arith.addf %248, %253 : vector<2x1xf32>
    %255 = vector.broadcast %229 : vector<2x1xf32> to vector<2x16xf32>
    %256 = arith.subf %211, %255 : vector<2x16xf32>
    %257 = arith.mulf %256, %256 : vector<2x16xf32>
    %cst_91 = arith.constant dense<0.000000e+00> : vector<2xf32>
    %258 = vector.multi_reduction <add>, %257, %cst_91 [1] : vector<2x16xf32> to vector<2xf32>
    %259 = vector.shape_cast %258 : vector<2xf32> to vector<2x1xf32>
    %260 = arith.addf %254, %259 : vector<2x1xf32>
    %cst_92 = arith.constant 0.0113636367 : f32
    %261 = vector.broadcast %cst_92 : f32 to vector<2x1xf32>
    %262 = arith.mulf %260, %261 : vector<2x1xf32>
    %cst_93 = arith.constant 9.99999974E-6 : f32
    %263 = vector.broadcast %cst_93 : f32 to vector<2x1xf32>
    %264 = arith.addf %262, %263 : vector<2x1xf32>
    %265 = math.rsqrt %264 : vector<2x1xf32>
    %cst_94 = arith.constant 0.000000e+00 : f32
    %266 = vector.broadcast %cst_94 : f32 to vector<2x64xf32>
    %267 = vector.broadcast %229 : vector<2x1xf32> to vector<2x32xf32>
    %268 = arith.subf %104, %267 : vector<2x32xf32>
    %269 = vector.broadcast %265 : vector<2x1xf32> to vector<2x32xf32>
    %270 = arith.mulf %268, %269 : vector<2x32xf32>
    %c87 = arith.constant 87 : index
    %c0_95 = arith.constant 0 : index
    %271 = vector.load %arg0[%c87, %c0_95] : memref<104x128xf32, #tpu.memory_space<vmem>>, vector<1x32xf32>
    %272 = vector.broadcast %271 : vector<1x32xf32> to vector<2x32xf32>
    %273 = arith.mulf %270, %272 : vector<2x32xf32>
    %c88 = arith.constant 88 : index
    %c0_96 = arith.constant 0 : index
    %274 = vector.load %arg0[%c88, %c0_96] : memref<104x128xf32, #tpu.memory_space<vmem>>, vector<1x32xf32>
    %275 = vector.broadcast %274 : vector<1x32xf32> to vector<2x32xf32>
    %276 = arith.addf %273, %275 : vector<2x32xf32>
    %277 = arith.truncf %276 : vector<2x32xf32> to vector<2x32xbf16>
    %c352 = arith.constant 352 : index
    %c0_97 = arith.constant 0 : index
    %278 = vector.load %arg1[%c352, %c0_97] : memref<448x128xbf16, #tpu.memory_space<vmem>>, vector<32x64xbf16>
    %cst_98 = arith.constant dense<0.000000e+00> : vector<2x64xf32>
    %279 = tpu.matmul %277, %278, %cst_98 {dimension_numbers = #tpu.dot_dimension_numbers<[1], [0], [0], [1], [0, 0, 1, 1], [], []>} : vector<2x32xbf16>, vector<32x64xbf16>, vector<2x64xf32> -> vector<2x64xf32>
    %280 = arith.addf %266, %279 : vector<2x64xf32>
    %281 = vector.broadcast %229 : vector<2x1xf32> to vector<2x8xf32>
    %282 = arith.subf %140, %281 : vector<2x8xf32>
    %283 = vector.broadcast %265 : vector<2x1xf32> to vector<2x8xf32>
    %284 = arith.mulf %282, %283 : vector<2x8xf32>
    %c89 = arith.constant 89 : index
    %c0_99 = arith.constant 0 : index
    %285 = vector.load %arg0[%c89, %c0_99] : memref<104x128xf32, #tpu.memory_space<vmem>>, vector<1x8xf32>
    %286 = vector.broadcast %285 : vector<1x8xf32> to vector<2x8xf32>
    %287 = arith.mulf %284, %286 : vector<2x8xf32>
    %c90 = arith.constant 90 : index
    %c0_100 = arith.constant 0 : index
    %288 = vector.load %arg0[%c90, %c0_100] : memref<104x128xf32, #tpu.memory_space<vmem>>, vector<1x8xf32>
    %289 = vector.broadcast %288 : vector<1x8xf32> to vector<2x8xf32>
    %290 = arith.addf %287, %289 : vector<2x8xf32>
    %291 = arith.truncf %290 : vector<2x8xf32> to vector<2x8xbf16>
    %c384 = arith.constant 384 : index
    %c0_101 = arith.constant 0 : index
    %292 = vector.load %arg1[%c384, %c0_101] : memref<448x128xbf16, #tpu.memory_space<vmem>>, vector<8x64xbf16>
    %cst_102 = arith.constant dense<0.000000e+00> : vector<2x64xf32>
    %293 = tpu.matmul %291, %292, %cst_102 {dimension_numbers = #tpu.dot_dimension_numbers<[1], [0], [0], [1], [0, 0, 1, 1], [], []>} : vector<2x8xbf16>, vector<8x64xbf16>, vector<2x64xf32> -> vector<2x64xf32>
    %294 = arith.addf %280, %293 : vector<2x64xf32>
    %295 = vector.broadcast %229 : vector<2x1xf32> to vector<2x16xf32>
    %296 = arith.subf %143, %295 : vector<2x16xf32>
    %297 = vector.broadcast %265 : vector<2x1xf32> to vector<2x16xf32>
    %298 = arith.mulf %296, %297 : vector<2x16xf32>
    %c91 = arith.constant 91 : index
    %c0_103 = arith.constant 0 : index
    %299 = vector.load %arg0[%c91, %c0_103] : memref<104x128xf32, #tpu.memory_space<vmem>>, vector<1x16xf32>
    %300 = vector.broadcast %299 : vector<1x16xf32> to vector<2x16xf32>
    %301 = arith.mulf %298, %300 : vector<2x16xf32>
    %c92 = arith.constant 92 : index
    %c0_104 = arith.constant 0 : index
    %302 = vector.load %arg0[%c92, %c0_104] : memref<104x128xf32, #tpu.memory_space<vmem>>, vector<1x16xf32>
    %303 = vector.broadcast %302 : vector<1x16xf32> to vector<2x16xf32>
    %304 = arith.addf %301, %303 : vector<2x16xf32>
    %305 = arith.truncf %304 : vector<2x16xf32> to vector<2x16xbf16>
    %c400 = arith.constant 400 : index
    %c0_105 = arith.constant 0 : index
    %306 = vector.load %arg1[%c400, %c0_105] : memref<448x128xbf16, #tpu.memory_space<vmem>>, vector<16x64xbf16>
    %cst_106 = arith.constant dense<0.000000e+00> : vector<2x64xf32>
    %307 = tpu.matmul %305, %306, %cst_106 {dimension_numbers = #tpu.dot_dimension_numbers<[1], [0], [0], [1], [0, 0, 1, 1], [], []>} : vector<2x16xbf16>, vector<16x64xbf16>, vector<2x64xf32> -> vector<2x64xf32>
    %308 = arith.addf %294, %307 : vector<2x64xf32>
    %309 = vector.broadcast %229 : vector<2x1xf32> to vector<2x16xf32>
    %310 = arith.subf %179, %309 : vector<2x16xf32>
    %311 = vector.broadcast %265 : vector<2x1xf32> to vector<2x16xf32>
    %312 = arith.mulf %310, %311 : vector<2x16xf32>
    %c93 = arith.constant 93 : index
    %c0_107 = arith.constant 0 : index
    %313 = vector.load %arg0[%c93, %c0_107] : memref<104x128xf32, #tpu.memory_space<vmem>>, vector<1x16xf32>
    %314 = vector.broadcast %313 : vector<1x16xf32> to vector<2x16xf32>
    %315 = arith.mulf %312, %314 : vector<2x16xf32>
    %c94 = arith.constant 94 : index
    %c0_108 = arith.constant 0 : index
    %316 = vector.load %arg0[%c94, %c0_108] : memref<104x128xf32, #tpu.memory_space<vmem>>, vector<1x16xf32>
    %317 = vector.broadcast %316 : vector<1x16xf32> to vector<2x16xf32>
    %318 = arith.addf %315, %317 : vector<2x16xf32>
    %319 = arith.truncf %318 : vector<2x16xf32> to vector<2x16xbf16>
    %c416 = arith.constant 416 : index
    %c0_109 = arith.constant 0 : index
    %320 = vector.load %arg1[%c416, %c0_109] : memref<448x128xbf16, #tpu.memory_space<vmem>>, vector<16x64xbf16>
    %cst_110 = arith.constant dense<0.000000e+00> : vector<2x64xf32>
    %321 = tpu.matmul %319, %320, %cst_110 {dimension_numbers = #tpu.dot_dimension_numbers<[1], [0], [0], [1], [0, 0, 1, 1], [], []>} : vector<2x16xbf16>, vector<16x64xbf16>, vector<2x64xf32> -> vector<2x64xf32>
    %322 = arith.addf %308, %321 : vector<2x64xf32>
    %323 = vector.broadcast %229 : vector<2x1xf32> to vector<2x16xf32>
    %324 = arith.subf %211, %323 : vector<2x16xf32>
    %325 = vector.broadcast %265 : vector<2x1xf32> to vector<2x16xf32>
    %326 = arith.mulf %324, %325 : vector<2x16xf32>
    %c95 = arith.constant 95 : index
    %c0_111 = arith.constant 0 : index
    %327 = vector.load %arg0[%c95, %c0_111] : memref<104x128xf32, #tpu.memory_space<vmem>>, vector<1x16xf32>
    %328 = vector.broadcast %327 : vector<1x16xf32> to vector<2x16xf32>
    %329 = arith.mulf %326, %328 : vector<2x16xf32>
    %c96 = arith.constant 96 : index
    %c0_112 = arith.constant 0 : index
    %330 = vector.load %arg0[%c96, %c0_112] : memref<104x128xf32, #tpu.memory_space<vmem>>, vector<1x16xf32>
    %331 = vector.broadcast %330 : vector<1x16xf32> to vector<2x16xf32>
    %332 = arith.addf %329, %331 : vector<2x16xf32>
    %333 = arith.truncf %332 : vector<2x16xf32> to vector<2x16xbf16>
    %c432 = arith.constant 432 : index
    %c0_113 = arith.constant 0 : index
    %334 = vector.load %arg1[%c432, %c0_113] : memref<448x128xbf16, #tpu.memory_space<vmem>>, vector<16x64xbf16>
    %cst_114 = arith.constant dense<0.000000e+00> : vector<2x64xf32>
    %335 = tpu.matmul %333, %334, %cst_114 {dimension_numbers = #tpu.dot_dimension_numbers<[1], [0], [0], [1], [0, 0, 1, 1], [], []>} : vector<2x16xbf16>, vector<16x64xbf16>, vector<2x64xf32> -> vector<2x64xf32>
    %336 = arith.addf %322, %335 : vector<2x64xf32>
    %c84 = arith.constant 84 : index
    %c0_115 = arith.constant 0 : index
    %337 = vector.load %arg0[%c84, %c0_115] : memref<104x128xf32, #tpu.memory_space<vmem>>, vector<1x64xf32>
    %338 = vector.broadcast %337 : vector<1x64xf32> to vector<2x64xf32>
    %339 = arith.addf %336, %338 : vector<2x64xf32>
    %cst_116 = arith.constant 0.000000e+00 : f32
    %340 = vector.broadcast %cst_116 : f32 to vector<2x64xf32>
    %341 = arith.maximumf %339, %340 : vector<2x64xf32>
    %c85 = arith.constant 85 : index
    %c0_117 = arith.constant 0 : index
    %342 = vector.load %arg0[%c85, %c0_117] : memref<104x128xf32, #tpu.memory_space<vmem>>, vector<1x64xf32>
    %343 = vector.broadcast %342 : vector<1x64xf32> to vector<2x64xf32>
    %344 = arith.mulf %341, %343 : vector<2x64xf32>
    %cst_118 = arith.constant dense<0.000000e+00> : vector<2xf32>
    %345 = vector.multi_reduction <add>, %344, %cst_118 [1] : vector<2x64xf32> to vector<2xf32>
    %346 = vector.shape_cast %345 : vector<2xf32> to vector<2x1xf32>
    %c86 = arith.constant 86 : index
    %c0_119 = arith.constant 0 : index
    %347 = vector.load %arg0[%c86, %c0_119] : memref<104x128xf32, #tpu.memory_space<vmem>>, vector<1x1xf32>
    %348 = vector.broadcast %347 : vector<1x1xf32> to vector<2x1xf32>
    %349 = arith.addf %346, %348 : vector<2x1xf32>
    %350 = vector.shape_cast %349 : vector<2x1xf32> to vector<2x1xf32>
    %351 = vector.broadcast %350 : vector<2x1xf32> to vector<2x128xf32>
    %c0_120 = arith.constant 0 : index
    %c0_121 = arith.constant 0 : index
    %352 = vector.load %arg3[%c0_120, %c0_121] : memref<2x128xf32, #tpu.memory_space<vmem>>, vector<2x128xf32>
    tpu.vector_store %arg3[%c0_120, %c0_121], %351 {strides = array<i32>} : memref<2x128xf32, #tpu.memory_space<vmem>>, vector<2x128xf32>,
    return
  }
}

</mosaic_0001>

<llo_original>
// kernel: forward.1
$region0: #{forward.1}
  #allocation0 [shape = 'u32[]', space=smem, size = 0x4, offset = 0x4, fixed_abs, tag = 'smem constant byte address 0x4 - core index']
  #allocation1 [shape = 'u32[144,128]{1,0:T(1,128)}', space=vmem, size = 0x12000, scoped, tag = 'internal scratch']
  %s0 = inlined_call_operand.hbm [shape: f32[104,128], index: 0, kind: input, shape index: {}]
  %s1 = inlined_call_operand.hbm [shape: bf16[448,128], index: 1, kind: input, shape index: {}]
  %s2 = inlined_call_operand.hbm [shape: f32[16,128], index: 2, kind: input, shape index: {}]
  %s3 = inlined_call_operand.vmem [shape: f32[2,128], index: 3, kind: output, shape index: {}]
  %s4 = sld [smem:[#allocation0]]
  $region34: #{forward.1} parent=0
    _
  %s6 = ssub.s32 1, %s4
  %s7 = scalar_select 0, %s6, %s4
  $region1: #{forward.1} parent=0
    #allocation2 [shape = 'u8[53248]{0}', space=vmem, size = 0xd000, scoped, tag = 'input window, operand 0, single buffered']
    #allocation3 [shape = 's32[1]{0}', space=sflag, size = 0x4, scoped, tag = 'scoped memory for forward.1']
    #allocation4 [shape = 'u8[114688]{0}', space=vmem, size = 0x1c000, scoped, tag = 'input window, operand 1, single buffered']
    #allocation5 [shape = 's32[1]{0}', space=sflag, size = 0x4, scoped, tag = 'scoped memory for forward.1']
    #allocation6 [shape = 'u8[8192]{0}', space=vmem, size = 0x2000, scoped, tag = 'input window, operand 2, single buffered']
    %8 = vsyncpa [#allocation3], 0
    %9 = vsyncpa [#allocation5], 0
    // Predicated region
    $region2: #{forward.1} parent=1 // pred_check
      _
    $region3: #{forward.1} parent=1 // pred_check_branch
      %11 = sbr.rel (0) target = $region5
    $region4: #{forward.1} parent=1 // pred_region
      %s13 = ssub.s32 1664, 1664
      %14 = vsyncadd [#allocation3], %s13
      %s15 = sshll.u32 [#allocation2], 4
      %s16 = int_to_ptr.vmem [resolvable:$true] %s15
      %21 = dma.hbm_to_vmem [thread:$0]  %s0, 1664, %s16, [#allocation3], 128, 128, 8
    $region5: #{forward.1} parent=1 // pred_fallthru
      _
    // Predicated region
    $region6: #{forward.1} parent=1 // pred_check
      _
    $region7: #{forward.1} parent=1 // pred_check_branch
      %23 = sbr.rel (0) target = $region9
    $region8: #{forward.1} parent=1 // pred_region
      %s25 = ssub.s32 3584, 3584
      %26 = vsyncadd [#allocation5], %s25
      %s27 = sshll.u32 [#allocation4], 4
      %s28 = int_to_ptr.vmem [resolvable:$true] %s27
      %33 = dma.hbm_to_vmem [thread:$0]  %s1, 3584, %s28, [#allocation5], 64, 64, 4
    $region9: #{forward.1} parent=1 // pred_fallthru
      _
    // Predicated region
    $region10: #{forward.1} parent=1 // pred_check
      _
    $region11: #{forward.1} parent=1 // pred_check_branch
      %35 = sbr.rel (0) target = $region13
    $region12: #{forward.1} parent=1 // pred_region
      %s37 = ssub.s32 256, 256
      %38 = vsyncadd [#allocation5], %s37
      %s39 = sshll.u32 [#allocation6], 4
      %s40 = int_to_ptr.vmem [resolvable:$true] %s39
      %45 = dma.hbm_to_vmem [thread:$0]  %s2, 256, %s40, [#allocation5], 128, 128, 8
    $region13: #{forward.1} parent=1 // pred_fallthru
      _
    // Predicated region
    $region14: #{forward.1} parent=1 // pred_check
      _
    $region15: #{forward.1} parent=1 // pred_check_branch
      %47 = sbr.rel (0) target = $region17
    $region16: #{forward.1} parent=1 // pred_region
      %48 = dma.done [#allocation3], 1664
    $region17: #{forward.1} parent=1 // pred_fallthru
      _
    // Predicated region
    $region18: #{forward.1} parent=1 // pred_check
      _
    $region19: #{forward.1} parent=1 // pred_check_branch
      %50 = sbr.rel (0) target = $region21
    $region20: #{forward.1} parent=1 // pred_region
      %51 = dma.done [#allocation5], 3584
    $region21: #{forward.1} parent=1 // pred_fallthru
      _
    // Predicated region
    $region22: #{forward.1} parent=1 // pred_check
      _
    $region23: #{forward.1} parent=1 // pred_check_branch
      %53 = sbr.rel (0) target = $region25
    $region24: #{forward.1} parent=1 // pred_region
      %54 = dma.done [#allocation5], 256
    $region25: #{forward.1} parent=1 // pred_fallthru
      _
    %v56 = vld [vmem:[#allocation6] sm:$0x3f]
    %v57 = vld [vmem:[#allocation6 + $0x8] sm:$0x3]
    %v58 = vpack.c.bf16 %v56, %v56
    %v59 = vld [vmem:[#allocation4] sm:$0xf]
    %v60 = vld [vmem:[#allocation4 + $0x4] sm:$0xf]
    %v61 = vld [vmem:[#allocation4 + $0x8] sm:$0xf]
    %v62 = vld [vmem:[#allocation4 + $0xc] sm:$0xf]
    %v63 = vld [vmem:[#allocation4 + $0x10] sm:$0xf]
    %v64 = vld [vmem:[#allocation4 + $0x14] sm:$0xf]
    %v65 = vld [vmem:[#allocation4 + $0x18] sm:$0xf]
    %v66 = vld [vmem:[#allocation4 + $0x1c] sm:$0xf]
    %v67 = vld [vmem:[#allocation4 + $0x20] sm:$0xf]
    %v68 = vld [vmem:[#allocation4 + $0x24] sm:$0xf]
    %v69 = vld [vmem:[#allocation4 + $0x28] sm:$0xf]
    %v70 = vld [vmem:[#allocation4 + $0x2c] sm:$0xf]
    %v71 = vld [vmem:[#allocation4 + $0x30] sm:$0xf]
    %v72 = vld [vmem:[#allocation4 + $0x34] sm:$0xf]
    %v73 = vld [vmem:[#allocation4 + $0x38] sm:$0xf]
    %v74 = vld [vmem:[#allocation4 + $0x3c] sm:$0xf]
    %v75 = vld [vmem:[#allocation2] sm:$0x3f]
    %v92 = vunpack.c.l.b16 %v59
    %v93 = vunpack.c.l.b16 %v60
    %v94 = vunpack.c.l.b16 %v61
    %v95 = vunpack.c.l.b16 %v62
    %v96 = vunpack.c.l.b16 %v63
    %v97 = vunpack.c.l.b16 %v64
    %v98 = vunpack.c.l.b16 %v65
    %v99 = vunpack.c.l.b16 %v66
    %v100 = vunpack.c.l.b16 %v67
    %v101 = vunpack.c.l.b16 %v68
    %v102 = vunpack.c.l.b16 %v69
    %v103 = vunpack.c.l.b16 %v70
    %v104 = vunpack.c.l.b16 %v71
    %v105 = vunpack.c.l.b16 %v72
    %v106 = vunpack.c.l.b16 %v73
    %v107 = vunpack.c.l.b16 %v74
    %v108 = vpack.c.b16 %v93, %v92
    %v109 = vpack.c.b16 %v95, %v94
    %v110 = vpack.c.b16 %v97, %v96
    %v111 = vpack.c.b16 %v99, %v98
    %v112 = vpack.c.b16 %v101, %v100
    %v113 = vpack.c.b16 %v103, %v102
    %v114 = vpack.c.b16 %v105, %v104
    %v115 = vpack.c.b16 %v107, %v106
    %124 = vmatprep.subr.bf16.mxu0 0
    %125 = vmatpush1.bf16.msra.mxu0 %v108
    %126 = vmatprep.subr.bf16.mxu0 0
    %127 = vmatpush1.bf16.msra.mxu0 %v109
    %128 = vmatprep.subr.bf16.mxu0 0
    %129 = vmatpush1.bf16.msra.mxu0 %v110
    %130 = vmatprep.subr.bf16.mxu0 0
    %131 = vmatpush1.bf16.msra.mxu0 %v111
    %132 = vmatprep.subr.bf16.mxu0 0
    %133 = vmatpush1.bf16.msra.mxu0 %v112
    %134 = vmatprep.subr.bf16.mxu0 0
    %135 = vmatpush1.bf16.msra.mxu0 %v113
    %136 = vmatprep.subr.bf16.mxu0 0
    %137 = vmatpush1.bf16.msra.mxu0 %v114
    %138 = vmatprep.subr.bf16.mxu0 0
    %139 = vmatpush1.bf16.msra.mxu0 %v115
    %140 = vmatprep.subr.bf16.mxu0 0
    %141 = vmatpush1.bf16.msra.mxu0 0
    %142 = vmatprep.subr.bf16.mxu0 0
    %143 = vmatpush1.bf16.msra.mxu0 0
    %144 = vmatprep.subr.bf16.mxu0 0
    %145 = vmatpush1.bf16.msra.mxu0 0
    %146 = vmatprep.subr.bf16.mxu0 0
    %147 = vmatpush1.bf16.msra.mxu0 0
    %148 = vmatprep.subr.bf16.mxu0 0
    %149 = vmatpush1.bf16.msra.mxu0 0
    %150 = vmatprep.subr.bf16.mxu0 0
    %151 = vmatpush1.bf16.msra.mxu0 0
    %152 = vmatprep.subr.bf16.mxu0 0
    %153 = vmatpush1.bf16.msra.mxu0 0
    %154 = vmatprep.subr.bf16.mxu0 0
    %155 = vmatpush1.bf16.msra.mxu0 0
    %156 = vmatprep.mubr.bf16.mxu0 0
    %157 = vmatmul.mubr.bf16.gmra.mrb[0].mxu0 %v58
    %v158 = vpop.f32.mrb[0].mxu0
    %v159 = vadd.f32 %v75, %v158
    %v160 = vpop.f32.mrb[0].mxu0
    %v161 = vpop.f32.mrb[0].mxu0
    %v162 = vpop.f32.mrb[0].mxu0
    %163 = vdwg.mxu0
    %v164 = vpack.c.bf16 %v159, %v159
    %v165 = vld [vmem:[#allocation4 + $0x40] sm:$0xf]
    %v166 = vld [vmem:[#allocation4 + $0x44] sm:$0xf]
    %v167 = vld [vmem:[#allocation4 + $0x48] sm:$0xf]
    %v168 = vld [vmem:[#allocation4 + $0x4c] sm:$0xf]
    %v169 = vld [vmem:[#allocation2 + $0x42] sm:$0x1]
    %v170 = vlaneseq
    %v171 = vshrl.u32 %v170, 7
    %v172 = vsub.s32 0, %v171
    %v173 = vrot.slane %v169, %v172
    %v178 = vunpack.c.l.b16 %v165
    %v179 = vunpack.c.l.b16 %v166
    %v180 = vunpack.c.l.b16 %v167
    %v181 = vunpack.c.l.b16 %v168
    %v182 = vpack.c.b16 %v179, %v178
    %v183 = vpack.c.b16 %v181, %v180
    %vm186 = vcmask 261120
    %v188 = vsel %vm186, %v164, 0
    %190 = vmatprep.subr.bf16.mxu0 0
    %191 = vmatpush1.bf16.msra.mxu0 %v182
    %192 = vmatprep.subr.bf16.mxu0 0
    %193 = vmatpush1.bf16.msra.mxu0 %v183
    %194 = vmatprep.subr.bf16.mxu0 0
    %195 = vmatpush1.bf16.msra.mxu0 0
    %196 = vmatprep.subr.bf16.mxu0 0
    %197 = vmatpush1.bf16.msra.mxu0 0
    %198 = vmatprep.subr.bf16.mxu0 0
    %199 = vmatpush1.bf16.msra.mxu0 0
    %200 = vmatprep.subr.bf16.mxu0 0
    %201 = vmatpush1.bf16.msra.mxu0 0
    %202 = vmatprep.subr.bf16.mxu0 0
    %203 = vmatpush1.bf16.msra.mxu0 0
    %204 = vmatprep.subr.bf16.mxu0 0
    %205 = vmatpush1.bf16.msra.mxu0 0
    %206 = vmatprep.subr.bf16.mxu0 0
    %207 = vmatpush1.bf16.msra.mxu0 0
    %208 = vmatprep.subr.bf16.mxu0 0
    %209 = vmatpush1.bf16.msra.mxu0 0
    %210 = vmatprep.subr.bf16.mxu0 0
    %211 = vmatpush1.bf16.msra.mxu0 0
    %212 = vmatprep.subr.bf16.mxu0 0
    %213 = vmatpush1.bf16.msra.mxu0 0
    %214 = vmatprep.subr.bf16.mxu0 0
    %215 = vmatpush1.bf16.msra.mxu0 0
    %216 = vmatprep.subr.bf16.mxu0 0
    %217 = vmatpush1.bf16.msra.mxu0 0
    %218 = vmatprep.subr.bf16.mxu0 0
    %219 = vmatpush1.bf16.msra.mxu0 0
    %220 = vmatprep.subr.bf16.mxu0 0
    %221 = vmatpush1.bf16.msra.mxu0 0
    %222 = vmatprep.mubr.bf16.mxu0 0
    %223 = vmatmul.mubr.bf16.gmra.mrb[0].mxu0 %v188
    %v224 = vpop.f32.mrb[0].mxu0
    %v225 = vadd.f32 %v173, %v224
    %v226 = vpop.f32.mrb[0].mxu0
    %v227 = vpop.f32.mrb[0].mxu0
    %v228 = vpop.f32.mrb[0].mxu0
    %229 = vdwg.mxu0
    %v230 = vld [vmem:[#allocation2 + $0x8] sm:$0xff]
    %v231 = vld [vmem:[#allocation2 + $0x10] sm:$0xff]
    %v232 = vld [vmem:[#allocation2 + $0x18] sm:$0xff]
    %v234 = vrot.slane %v225, 2
    %v236 = vrot.slane %v225, 4
    %v238 = vrot.slane %v225, 6
    %vm240 = vcmask 1045504
    %v241 = vsel %vm240, %v225, %v234
    %vm242 = vcmask 1043456
    %v243 = vsel %vm242, %v234, %v236
    %vm244 = vcmask 1041408
    %v245 = vsel %vm244, %v236, %v238
    %249 = vrot.lane.b32.xlu0 %v230, 32
    %v250 = vpop.permute.xlu0 %249
    %251 = vrot.lane.b32.xlu0 %v231, 32
    %v252 = vpop.permute.xlu0 %251
    %253 = vrot.lane.b32.xlu0 %v232, 32
    %v254 = vpop.permute.xlu0 %253
    %v258 = vmul.f32 %v241, %v250
    %v259 = vmul.f32 %v243, %v252
    %v260 = vmul.f32 %v245, %v254
    %v261 = vld [vmem:[#allocation2 + $0x20] sm:$0x3f]
    %265 = vrot.lane.b32.xlu0 %v258, 96
    %v266 = vpop.permute.xlu0 %265
    %267 = vrot.lane.b32.xlu0 %v259, 96
    %v268 = vpop.permute.xlu0 %267
    %269 = vrot.lane.b32.xlu0 %v260, 96
    %v270 = vpop.permute.xlu0 %269
    %v271 = vsel %vm186, %v225, 0
    %v273 = vsel %vm186, %v266, 0
    %v275 = vsel %vm186, %v268, 0
    %v277 = vsel %vm186, %v270, 0
    %279 = vmatprep.subr.mxu0 0.0
    %280 = vmatpush1.xpose.msra.mxu0 %v273
    %281 = vmatprep.subr.mxu0 0.0
    %282 = vmatpush1.xpose.msra.mxu0 %v275
    %283 = vmatprep.subr.mxu0 0.0
    %284 = vmatpush1.xpose.msra.mxu0 %v277
    %285 = vmatprep.subr.mxu0 0.0
    %286 = vmatpush1.xpose.msra.mxu0 0.0
    %287 = vmatprep.subr.mxu0 0.0
    %288 = vmatpush1.xpose.msra.mxu0 0.0
    %289 = vmatprep.subr.mxu0 0.0
    %290 = vmatpush1.xpose.msra.mxu0 0.0
    %291 = vmatprep.subr.mxu0 0.0
    %292 = vmatpush1.xpose.msra.mxu0 0.0
    %293 = vmatprep.subr.mxu0 0.0
    %294 = vmatpush1.xpose.msra.mxu0 0.0
    %295 = vmatprep.subr.mxu0 0.0
    %296 = vmatpush1.xpose.msra.mxu0 0.0
    %297 = vmatprep.subr.mxu0 0.0
    %298 = vmatpush1.xpose.msra.mxu0 0.0
    %299 = vmatprep.subr.mxu0 0.0
    %300 = vmatpush1.xpose.msra.mxu0 0.0
    %301 = vmatprep.subr.mxu0 0.0
    %302 = vmatpush1.xpose.msra.mxu0 0.0
    %303 = vmatprep.subr.mxu0 0.0
    %304 = vmatpush1.xpose.msra.mxu0 0.0
    %305 = vmatprep.subr.mxu0 0.0
    %306 = vmatpush1.xpose.msra.mxu0 0.0
    %307 = vmatprep.subr.mxu0 0.0
    %308 = vmatpush1.xpose.msra.mxu0 0.0
    %309 = vmatprep.subr.mxu0 0.0
    %310 = vmatpush1.xpose.msra.mxu0 0.0
    %311 = vmatprep.subr.mxu0 0.0
    %312 = vmatpush1.xpose.msra.mxu0 0.0
    %313 = vmatprep.subr.mxu0 0.0
    %314 = vmatpush1.xpose.msra.mxu0 0.0
    %315 = vmatprep.subr.mxu0 0.0
    %316 = vmatpush1.xpose.msra.mxu0 0.0
    %317 = vmatprep.subr.mxu0 0.0
    %318 = vmatpush1.xpose.msra.mxu0 0.0
    %319 = vmatprep.subr.mxu0 0.0
    %320 = vmatpush1.xpose.msra.mxu0 0.0
    %321 = vmatprep.subr.mxu0 0.0
    %322 = vmatpush1.xpose.msra.mxu0 0.0
    %323 = vmatprep.subr.mxu0 0.0
    %324 = vmatpush1.xpose.msra.mxu0 0.0
    %325 = vmatprep.subr.mxu0 0.0
    %326 = vmatpush1.xpose.msra.mxu0 0.0
    %327 = vmatprep.subr.mxu0 0.0
    %328 = vmatpush1.xpose.msra.mxu0 0.0
    %329 = vmatprep.subr.mxu0 0.0
    %330 = vmatpush1.xpose.msra.mxu0 0.0
    %331 = vmatprep.subr.mxu0 0.0
    %332 = vmatpush1.xpose.msra.mxu0 0.0
    %333 = vmatprep.subr.mxu0 0.0
    %334 = vmatpush1.xpose.msra.mxu0 0.0
    %335 = vmatprep.subr.mxu0 0.0
    %336 = vmatpush1.xpose.msra.mxu0 0.0
    %337 = vmatprep.subr.mxu0 0.0
    %338 = vmatpush1.xpose.msra.mxu0 0.0
    %339 = vmatprep.subr.mxu0 0.0
    %340 = vmatpush1.xpose.msra.mxu0 0.0
    %341 = vmatprep.subr.mxu0 0.0
    %342 = vmatpush1.xpose.msra.mxu0 0.0
    %343 = vmatprep.mubr.f32.mxu0 0.0
    %344 = vmatmul.mubr.f32.gmra.mrb[0].mxu0 %v271
    %v345 = vpop.f32.mrb[0].mxu0
    %v346 = vadd.f32 %v261, %v345
    %v347 = vpop.f32.mrb[0].mxu0
    %348 = vdwg.mxu0
    %vm349 = vcmask 193536
    %v350 = vsel %vm349, %v346, -inf
    %351 = vmax.xlane.f32.xlu0 %v350
    %v352 = vpop.xlane.xlu0 %351
    %v353 = vsub.f32 %v346, %v352
    %v354 = vmul.f32 %v353, 1.442695
    %v355 = vpow.pop %v354
    %v356 = vld [vmem:[#allocation2 + $0x28] sm:$0xff]
    %v357 = vld [vmem:[#allocation2 + $0x30] sm:$0xff]
    %v358 = vld [vmem:[#allocation2 + $0x38] sm:$0xff]
    %vm359 = vcmask 195584
    %v361 = vsel %vm359, %v355, 0
    %363 = vmatprep.subr.mxu0 0.0
    %364 = vmatpush1.msra.mxu0 %v356
    %365 = vmatprep.subr.mxu0 0.0
    %366 = vmatpush1.msra.mxu0 %v357
    %367 = vmatprep.subr.mxu0 0.0
    %368 = vmatpush1.msra.mxu0 %v358
    %369 = vmatprep.subr.mxu0 0.0
    %370 = vmatpush1.msra.mxu0 0.0
    %371 = vmatprep.subr.mxu0 0.0
    %372 = vmatpush1.msra.mxu0 0.0
    %373 = vmatprep.subr.mxu0 0.0
    %374 = vmatpush1.msra.mxu0 0.0
    %375 = vmatprep.subr.mxu0 0.0
    %376 = vmatpush1.msra.mxu0 0.0
    %377 = vmatprep.subr.mxu0 0.0
    %378 = vmatpush1.msra.mxu0 0.0
    %379 = vmatprep.subr.mxu0 0.0
    %380 = vmatpush1.msra.mxu0 0.0
    %381 = vmatprep.subr.mxu0 0.0
    %382 = vmatpush1.msra.mxu0 0.0
    %383 = vmatprep.subr.mxu0 0.0
    %384 = vmatpush1.msra.mxu0 0.0
    %385 = vmatprep.subr.mxu0 0.0
    %386 = vmatpush1.msra.mxu0 0.0
    %387 = vmatprep.subr.mxu0 0.0
    %388 = vmatpush1.msra.mxu0 0.0
    %389 = vmatprep.subr.mxu0 0.0
    %390 = vmatpush1.msra.mxu0 0.0
    %391 = vmatprep.subr.mxu0 0.0
    %392 = vmatpush1.msra.mxu0 0.0
    %393 = vmatprep.subr.mxu0 0.0
    %394 = vmatpush1.msra.mxu0 0.0
    %395 = vmatprep.subr.mxu0 0.0
    %396 = vmatpush1.msra.mxu0 0.0
    %397 = vmatprep.subr.mxu0 0.0
    %398 = vmatpush1.msra.mxu0 0.0
    %399 = vmatprep.subr.mxu0 0.0
    %400 = vmatpush1.msra.mxu0 0.0
    %401 = vmatprep.subr.mxu0 0.0
    %402 = vmatpush1.msra.mxu0 0.0
    %403 = vmatprep.subr.mxu0 0.0
    %404 = vmatpush1.msra.mxu0 0.0
    %405 = vmatprep.subr.mxu0 0.0
    %406 = vmatpush1.msra.mxu0 0.0
    %407 = vmatprep.subr.mxu0 0.0
    %408 = vmatpush1.msra.mxu0 0.0
    %409 = vmatprep.subr.mxu0 0.0
    %410 = vmatpush1.msra.mxu0 0.0
    %411 = vmatprep.subr.mxu0 0.0
    %412 = vmatpush1.msra.mxu0 0.0
    %413 = vmatprep.subr.mxu0 0.0
    %414 = vmatpush1.msra.mxu0 0.0
    %415 = vmatprep.subr.mxu0 0.0
    %416 = vmatpush1.msra.mxu0 0.0
    %417 = vmatprep.subr.mxu0 0.0
    %418 = vmatpush1.msra.mxu0 0.0
    %419 = vmatprep.subr.mxu0 0.0
    %420 = vmatpush1.msra.mxu0 0.0
    %421 = vmatprep.subr.mxu0 0.0
    %422 = vmatpush1.msra.mxu0 0.0
    %423 = vmatprep.subr.mxu0 0.0
    %424 = vmatpush1.msra.mxu0 0.0
    %425 = vmatprep.subr.mxu0 0.0
    %426 = vmatpush1.msra.mxu0 0.0
    %427 = vmatprep.mubr.f32.mxu0 0.0
    %428 = vmatmul.mubr.f32.gmra.mrb[0].mxu0 %v361
    %v429 = vpop.f32.mrb[0].mxu0
    %v430 = vadd.f32 0.0, %v429
    %v431 = vpop.f32.mrb[0].mxu0
    %432 = vdwg.mxu0
    %v433 = vrcp.pop %v430
    %v434 = vmul.f32 %v355, %v433
    %435 = vrot.lane.b32.xlu0 %v230, 64
    %v436 = vpop.permute.xlu0 %435
    %437 = vrot.lane.b32.xlu0 %v231, 64
    %v438 = vpop.permute.xlu0 %437
    %439 = vrot.lane.b32.xlu0 %v232, 64
    %v440 = vpop.permute.xlu0 %439
    %v444 = vmul.f32 %v241, %v436
    %v445 = vmul.f32 %v243, %v438
    %v446 = vmul.f32 %v245, %v440
    %450 = vrot.lane.b32.xlu0 %v444, 64
    %v451 = vpop.permute.xlu0 %450
    %452 = vrot.lane.b32.xlu0 %v445, 64
    %v453 = vpop.permute.xlu0 %452
    %454 = vrot.lane.b32.xlu0 %v446, 64
    %v455 = vpop.permute.xlu0 %454
    %v460 = vsel %vm359, %v434, 0
    %462 = vmatprep.subr.mxu0 0.0
    %463 = vmatpush1.msra.mxu0 %v451
    %464 = vmatprep.subr.mxu0 0.0
    %465 = vmatpush1.msra.mxu0 %v453
    %466 = vmatprep.subr.mxu0 0.0
    %467 = vmatpush1.msra.mxu0 %v455
    %468 = vmatprep.subr.mxu0 0.0
    %469 = vmatpush1.msra.mxu0 0.0
    %470 = vmatprep.subr.mxu0 0.0
    %471 = vmatpush1.msra.mxu0 0.0
    %472 = vmatprep.subr.mxu0 0.0
    %473 = vmatpush1.msra.mxu0 0.0
    %474 = vmatprep.subr.mxu0 0.0
    %475 = vmatpush1.msra.mxu0 0.0
    %476 = vmatprep.subr.mxu0 0.0
    %477 = vmatpush1.msra.mxu0 0.0
    %478 = vmatprep.subr.mxu0 0.0
    %479 = vmatpush1.msra.mxu0 0.0
    %480 = vmatprep.subr.mxu0 0.0
    %481 = vmatpush1.msra.mxu0 0.0
    %482 = vmatprep.subr.mxu0 0.0
    %483 = vmatpush1.msra.mxu0 0.0
    %484 = vmatprep.subr.mxu0 0.0
    %485 = vmatpush1.msra.mxu0 0.0
    %486 = vmatprep.subr.mxu0 0.0
    %487 = vmatpush1.msra.mxu0 0.0
    %488 = vmatprep.subr.mxu0 0.0
    %489 = vmatpush1.msra.mxu0 0.0
    %490 = vmatprep.subr.mxu0 0.0
    %491 = vmatpush1.msra.mxu0 0.0
    %492 = vmatprep.subr.mxu0 0.0
    %493 = vmatpush1.msra.mxu0 0.0
    %494 = vmatprep.subr.mxu0 0.0
    %495 = vmatpush1.msra.mxu0 0.0
    %496 = vmatprep.subr.mxu0 0.0
    %497 = vmatpush1.msra.mxu0 0.0
    %498 = vmatprep.subr.mxu0 0.0
    %499 = vmatpush1.msra.mxu0 0.0
    %500 = vmatprep.subr.mxu0 0.0
    %501 = vmatpush1.msra.mxu0 0.0
    %502 = vmatprep.subr.mxu0 0.0
    %503 = vmatpush1.msra.mxu0 0.0
    %504 = vmatprep.subr.mxu0 0.0
    %505 = vmatpush1.msra.mxu0 0.0
    %506 = vmatprep.subr.mxu0 0.0
    %507 = vmatpush1.msra.mxu0 0.0
    %508 = vmatprep.subr.mxu0 0.0
    %509 = vmatpush1.msra.mxu0 0.0
    %510 = vmatprep.subr.mxu0 0.0
    %511 = vmatpush1.msra.mxu0 0.0
    %512 = vmatprep.subr.mxu0 0.0
    %513 = vmatpush1.msra.mxu0 0.0
    %514 = vmatprep.subr.mxu0 0.0
    %515 = vmatpush1.msra.mxu0 0.0
    %516 = vmatprep.subr.mxu0 0.0
    %517 = vmatpush1.msra.mxu0 0.0
    %518 = vmatprep.subr.mxu0 0.0
    %519 = vmatpush1.msra.mxu0 0.0
    %520 = vmatprep.subr.mxu0 0.0
    %521 = vmatpush1.msra.mxu0 0.0
    %522 = vmatprep.subr.mxu0 0.0
    %523 = vmatpush1.msra.mxu0 0.0
    %524 = vmatprep.subr.mxu0 0.0
    %525 = vmatpush1.msra.mxu0 0.0
    %526 = vmatprep.mubr.f32.mxu0 0.0
    %527 = vmatmul.mubr.f32.gmra.mrb[0].mxu0 %v460
    %v528 = vpop.f32.mrb[0].mxu0
    %v529 = vadd.f32 0.0, %v528
    %v530 = vpop.f32.mrb[0].mxu0
    %531 = vdwg.mxu0
    %v532 = vpack.c.bf16 %v529, %v529
    %v533 = vld [vmem:[#allocation4 + $0x50] sm:$0xf]
    %v534 = vld [vmem:[#allocation4 + $0x54] sm:$0xf]
    %v535 = vld [vmem:[#allocation4 + $0x58] sm:$0xf]
    %v536 = vld [vmem:[#allocation4 + $0x5c] sm:$0xf]
    %v537 = vld [vmem:[#allocation2 + $0x43] sm:$0x1]
    %v538 = vlaneseq
    %v539 = vshrl.u32 %v538, 7
    %v540 = vsub.s32 0, %v539
    %v541 = vrot.slane %v537, %v540
    %v546 = vunpack.c.l.b16 %v533
    %v547 = vunpack.c.l.b16 %v534
    %v548 = vunpack.c.l.b16 %v535
    %v549 = vunpack.c.l.b16 %v536
    %v550 = vpack.c.b16 %v547, %v546
    %v551 = vpack.c.b16 %v549, %v548
    %v555 = vsel %vm186, %v532, 0
    %557 = vmatprep.subr.bf16.mxu0 0
    %558 = vmatpush1.bf16.msra.mxu0 %v550
    %559 = vmatprep.subr.bf16.mxu0 0
    %560 = vmatpush1.bf16.msra.mxu0 %v551
    %561 = vmatprep.subr.bf16.mxu0 0
    %562 = vmatpush1.bf16.msra.mxu0 0
    %563 = vmatprep.subr.bf16.mxu0 0
    %564 = vmatpush1.bf16.msra.mxu0 0
    %565 = vmatprep.subr.bf16.mxu0 0
    %566 = vmatpush1.bf16.msra.mxu0 0
    %567 = vmatprep.subr.bf16.mxu0 0
    %568 = vmatpush1.bf16.msra.mxu0 0
    %569 = vmatprep.subr.bf16.mxu0 0
    %570 = vmatpush1.bf16.msra.mxu0 0
    %571 = vmatprep.subr.bf16.mxu0 0
    %572 = vmatpush1.bf16.msra.mxu0 0
    %573 = vmatprep.subr.bf16.mxu0 0
    %574 = vmatpush1.bf16.msra.mxu0 0
    %575 = vmatprep.subr.bf16.mxu0 0
    %576 = vmatpush1.bf16.msra.mxu0 0
    %577 = vmatprep.subr.bf16.mxu0 0
    %578 = vmatpush1.bf16.msra.mxu0 0
    %579 = vmatprep.subr.bf16.mxu0 0
    %580 = vmatpush1.bf16.msra.mxu0 0
    %581 = vmatprep.subr.bf16.mxu0 0
    %582 = vmatpush1.bf16.msra.mxu0 0
    %583 = vmatprep.subr.bf16.mxu0 0
    %584 = vmatpush1.bf16.msra.mxu0 0
    %585 = vmatprep.subr.bf16.mxu0 0
    %586 = vmatpush1.bf16.msra.mxu0 0
    %587 = vmatprep.subr.bf16.mxu0 0
    %588 = vmatpush1.bf16.msra.mxu0 0
    %589 = vmatprep.mubr.bf16.mxu0 0
    %590 = vmatmul.mubr.bf16.gmra.mrb[0].mxu0 %v555
    %v591 = vpop.f32.mrb[0].mxu0
    %v592 = vadd.f32 %v541, %v591
    %v593 = vpop.f32.mrb[0].mxu0
    %v594 = vpop.f32.mrb[0].mxu0
    %v595 = vpop.f32.mrb[0].mxu0
    %596 = vdwg.mxu0
    %v597 = vadd.f32 %v159, %v592
    %v598 = vld [vmem:[#allocation2 + $0x44] sm:$0x1]
    %v599 = vld [vmem:[#allocation2 + $0x45] sm:$0x1]
    %vm600 = vcmask 259072
    %v601 = vsel %vm600, %v597, 0.0
    %602 = vadd.xlane.f32.xlu0 %v601
    %v603 = vpop.xlane.xlu0 %602
    %v604 = vrcp.pop 32.0
    %v605 = vmul.f32 %v603, %v604
    %v606 = vsub.f32 %v597, %v605
    %v607 = vmul.f32 %v606, %v606
    %v608 = vsel %vm600, %v607, 0.0
    %609 = vadd.xlane.f32.xlu0 %v608
    %v610 = vpop.xlane.xlu0 %609
    %v611 = vmul.f32 %v610, %v604
    %v612 = vadd.f32 %v611, 1e-05
    %v613 = vrsqrt.pop %v612
    %v614 = vmul.f32 %v606, %v613
    %v615 = vlaneseq
    %v616 = vshrl.u32 %v615, 7
    %v617 = vsub.s32 0, %v616
    %v618 = vrot.slane %v598, %v617
    %v619 = vmul.f32 %v614, %v618
    %v620 = vlaneseq
    %v621 = vshrl.u32 %v620, 7
    %v622 = vsub.s32 0, %v621
    %v623 = vrot.slane %v599, %v622
    %v624 = vadd.f32 %v619, %v623
    %v625 = vpack.c.bf16 %v624, %v624
    %v626 = vld [vmem:[#allocation4 + $0x60] sm:$0xf]
    %v627 = vld [vmem:[#allocation4 + $0x64] sm:$0xf]
    %v628 = vld [vmem:[#allocation4 + $0x68] sm:$0xf]
    %v629 = vld [vmem:[#allocation4 + $0x6c] sm:$0xf]
    %v630 = vld [vmem:[#allocation2 + $0x46] sm:$0x1]
    %v631 = vlaneseq
    %v632 = vshrl.u32 %v631, 7
    %v633 = vsub.s32 0, %v632
    %v634 = vrot.slane %v630, %v633
    %v639 = vunpack.c.l.b16 %v626
    %v640 = vunpack.c.l.b16 %v627
    %v641 = vunpack.c.l.b16 %v628
    %v642 = vunpack.c.l.b16 %v629
    %v643 = vpack.c.b16 %v640, %v639
    %v644 = vpack.c.b16 %v642, %v641
    %v648 = vsel %vm186, %v625, 0
    %650 = vmatprep.subr.bf16.mxu0 0
    %651 = vmatpush1.bf16.msra.mxu0 %v643
    %652 = vmatprep.subr.bf16.mxu0 0
    %653 = vmatpush1.bf16.msra.mxu0 %v644
    %654 = vmatprep.subr.bf16.mxu0 0
    %655 = vmatpush1.bf16.msra.mxu0 0
    %656 = vmatprep.subr.bf16.mxu0 0
    %657 = vmatpush1.bf16.msra.mxu0 0
    %658 = vmatprep.subr.bf16.mxu0 0
    %659 = vmatpush1.bf16.msra.mxu0 0
    %660 = vmatprep.subr.bf16.mxu0 0
    %661 = vmatpush1.bf16.msra.mxu0 0
    %662 = vmatprep.subr.bf16.mxu0 0
    %663 = vmatpush1.bf16.msra.mxu0 0
    %664 = vmatprep.subr.bf16.mxu0 0
    %665 = vmatpush1.bf16.msra.mxu0 0
    %666 = vmatprep.subr.bf16.mxu0 0
    %667 = vmatpush1.bf16.msra.mxu0 0
    %668 = vmatprep.subr.bf16.mxu0 0
    %669 = vmatpush1.bf16.msra.mxu0 0
    %670 = vmatprep.subr.bf16.mxu0 0
    %671 = vmatpush1.bf16.msra.mxu0 0
    %672 = vmatprep.subr.bf16.mxu0 0
    %673 = vmatpush1.bf16.msra.mxu0 0
    %674 = vmatprep.subr.bf16.mxu0 0
    %675 = vmatpush1.bf16.msra.mxu0 0
    %676 = vmatprep.subr.bf16.mxu0 0
    %677 = vmatpush1.bf16.msra.mxu0 0
    %678 = vmatprep.subr.bf16.mxu0 0
    %679 = vmatpush1.bf16.msra.mxu0 0
    %680 = vmatprep.subr.bf16.mxu0 0
    %681 = vmatpush1.bf16.msra.mxu0 0
    %682 = vmatprep.mubr.bf16.mxu0 0
    %683 = vmatmul.mubr.bf16.gmra.mrb[0].mxu0 %v648
    %v684 = vpop.f32.mrb[0].mxu0
    %v685 = vadd.f32 %v634, %v684
    %v686 = vpop.f32.mrb[0].mxu0
    %v687 = vpop.f32.mrb[0].mxu0
    %v688 = vpop.f32.mrb[0].mxu0
    %689 = vdwg.mxu0
    %v690 = vmax.f32 %v685, 0.0
    %v691 = vpack.c.bf16 %v690, %v690
    %v692 = vld [vmem:[#allocation4 + $0x70] sm:$0xf]
    %v693 = vld [vmem:[#allocation4 + $0x74] sm:$0xf]
    %v694 = vld [vmem:[#allocation4 + $0x78] sm:$0xf]
    %v695 = vld [vmem:[#allocation4 + $0x7c] sm:$0xf]
    %v696 = vld [vmem:[#allocation4 + $0x80] sm:$0xf]
    %v697 = vld [vmem:[#allocation4 + $0x84] sm:$0xf]
    %v698 = vld [vmem:[#allocation4 + $0x88] sm:$0xf]
    %v699 = vld [vmem:[#allocation4 + $0x8c] sm:$0xf]
    %v700 = vld [vmem:[#allocation2 + $0x47] sm:$0x1]
    %v701 = vlaneseq
    %v702 = vshrl.u32 %v701, 7
    %v703 = vsub.s32 0, %v702
    %v704 = vrot.slane %v700, %v703
    %v713 = vunpack.c.l.b16 %v692
    %v714 = vunpack.c.l.b16 %v693
    %v715 = vunpack.c.l.b16 %v694
    %v716 = vunpack.c.l.b16 %v695
    %v717 = vunpack.c.l.b16 %v696
    %v718 = vunpack.c.l.b16 %v697
    %v719 = vunpack.c.l.b16 %v698
    %v720 = vunpack.c.l.b16 %v699
    %v721 = vpack.c.b16 %v714, %v713
    %v722 = vpack.c.b16 %v716, %v715
    %v723 = vpack.c.b16 %v718, %v717
    %v724 = vpack.c.b16 %v720, %v719
    %vm729 = vcmask 523264
    %v731 = vsel %vm729, %v691, 0
    %733 = vmatprep.subr.bf16.mxu0 0
    %734 = vmatpush1.bf16.msra.mxu0 %v721
    %735 = vmatprep.subr.bf16.mxu0 0
    %736 = vmatpush1.bf16.msra.mxu0 %v722
    %737 = vmatprep.subr.bf16.mxu0 0
    %738 = vmatpush1.bf16.msra.mxu0 %v723
    %739 = vmatprep.subr.bf16.mxu0 0
    %740 = vmatpush1.bf16.msra.mxu0 %v724
    %741 = vmatprep.subr.bf16.mxu0 0
    %742 = vmatpush1.bf16.msra.mxu0 0
    %743 = vmatprep.subr.bf16.mxu0 0
    %744 = vmatpush1.bf16.msra.mxu0 0
    %745 = vmatprep.subr.bf16.mxu0 0
    %746 = vmatpush1.bf16.msra.mxu0 0
    %747 = vmatprep.subr.bf16.mxu0 0
    %748 = vmatpush1.bf16.msra.mxu0 0
    %749 = vmatprep.subr.bf16.mxu0 0
    %750 = vmatpush1.bf16.msra.mxu0 0
    %751 = vmatprep.subr.bf16.mxu0 0
    %752 = vmatpush1.bf16.msra.mxu0 0
    %753 = vmatprep.subr.bf16.mxu0 0
    %754 = vmatpush1.bf16.msra.mxu0 0
    %755 = vmatprep.subr.bf16.mxu0 0
    %756 = vmatpush1.bf16.msra.mxu0 0
    %757 = vmatprep.subr.bf16.mxu0 0
    %758 = vmatpush1.bf16.msra.mxu0 0
    %759 = vmatprep.subr.bf16.mxu0 0
    %760 = vmatpush1.bf16.msra.mxu0 0
    %761 = vmatprep.subr.bf16.mxu0 0
    %762 = vmatpush1.bf16.msra.mxu0 0
    %763 = vmatprep.subr.bf16.mxu0 0
    %764 = vmatpush1.bf16.msra.mxu0 0
    %765 = vmatprep.mubr.bf16.mxu0 0
    %766 = vmatmul.mubr.bf16.gmra.mrb[0].mxu0 %v731
    %v767 = vpop.f32.mrb[0].mxu0
    %v768 = vadd.f32 %v704, %v767
    %v769 = vpop.f32.mrb[0].mxu0
    %v770 = vpop.f32.mrb[0].mxu0
    %v771 = vpop.f32.mrb[0].mxu0
    %772 = vdwg.mxu0
    %v773 = vadd.f32 %v624, %v768
    %v774 = vld [vmem:[#allocation2 + $0x48] sm:$0x1]
    %v775 = vld [vmem:[#allocation2 + $0x49] sm:$0x1]
    %v776 = vsel %vm600, %v773, 0.0
    %777 = vadd.xlane.f32.xlu0 %v776
    %v778 = vpop.xlane.xlu0 %777
    %v779 = vmul.f32 %v778, %v604
    %v780 = vsub.f32 %v773, %v779
    %v781 = vmul.f32 %v780, %v780
    %v782 = vsel %vm600, %v781, 0.0
    %783 = vadd.xlane.f32.xlu0 %v782
    %v784 = vpop.xlane.xlu0 %783
    %v785 = vmul.f32 %v784, %v604
    %v786 = vadd.f32 %v785, 1e-05
    %v787 = vrsqrt.pop %v786
    %v788 = vmul.f32 %v780, %v787
    %v789 = vlaneseq
    %v790 = vshrl.u32 %v789, 7
    %v791 = vsub.s32 0, %v790
    %v792 = vrot.slane %v774, %v791
    %v793 = vmul.f32 %v788, %v792
    %v794 = vlaneseq
    %v795 = vshrl.u32 %v794, 7
    %v796 = vsub.s32 0, %v795
    %v797 = vrot.slane %v775, %v796
    %v798 = vadd.f32 %v793, %v797
    %v799 = vld [vmem:[#allocation2 + $0x40] sm:$0x3]
    %vm800 = vcmask 48128
    %v802 = vsel %vm800, %v799, 0
    %v805 = vsel %vm240, %v798, 0
    %807 = vmatprep.subr.mxu0 0.0
    %808 = vmatpush1.msra.mxu0 %v805
    %809 = vmatprep.subr.mxu0 0.0
    %810 = vmatpush1.msra.mxu0 0.0
    %811 = vmatprep.subr.mxu0 0.0
    %812 = vmatpush1.msra.mxu0 0.0
    %813 = vmatprep.subr.mxu0 0.0
    %814 = vmatpush1.msra.mxu0 0.0
    %815 = vmatprep.subr.mxu0 0.0
    %816 = vmatpush1.msra.mxu0 0.0
    %817 = vmatprep.subr.mxu0 0.0
    %818 = vmatpush1.msra.mxu0 0.0
    %819 = vmatprep.subr.mxu0 0.0
    %820 = vmatpush1.msra.mxu0 0.0
    %821 = vmatprep.subr.mxu0 0.0
    %822 = vmatpush1.msra.mxu0 0.0
    %823 = vmatprep.subr.mxu0 0.0
    %824 = vmatpush1.msra.mxu0 0.0
    %825 = vmatprep.subr.mxu0 0.0
    %826 = vmatpush1.msra.mxu0 0.0
    %827 = vmatprep.subr.mxu0 0.0
    %828 = vmatpush1.msra.mxu0 0.0
    %829 = vmatprep.subr.mxu0 0.0
    %830 = vmatpush1.msra.mxu0 0.0
    %831 = vmatprep.subr.mxu0 0.0
    %832 = vmatpush1.msra.mxu0 0.0
    %833 = vmatprep.subr.mxu0 0.0
    %834 = vmatpush1.msra.mxu0 0.0
    %835 = vmatprep.subr.mxu0 0.0
    %836 = vmatpush1.msra.mxu0 0.0
    %837 = vmatprep.subr.mxu0 0.0
    %838 = vmatpush1.msra.mxu0 0.0
    %839 = vmatprep.subr.mxu0 0.0
    %840 = vmatpush1.msra.mxu0 0.0
    %841 = vmatprep.subr.mxu0 0.0
    %842 = vmatpush1.msra.mxu0 0.0
    %843 = vmatprep.subr.mxu0 0.0
    %844 = vmatpush1.msra.mxu0 0.0
    %845 = vmatprep.subr.mxu0 0.0
    %846 = vmatpush1.msra.mxu0 0.0
    %847 = vmatprep.subr.mxu0 0.0
    %848 = vmatpush1.msra.mxu0 0.0
    %849 = vmatprep.subr.mxu0 0.0
    %850 = vmatpush1.msra.mxu0 0.0
    %851 = vmatprep.subr.mxu0 0.0
    %852 = vmatpush1.msra.mxu0 0.0
    %853 = vmatprep.subr.mxu0 0.0
    %854 = vmatpush1.msra.mxu0 0.0
    %855 = vmatprep.subr.mxu0 0.0
    %856 = vmatpush1.msra.mxu0 0.0
    %857 = vmatprep.subr.mxu0 0.0
    %858 = vmatpush1.msra.mxu0 0.0
    %859 = vmatprep.subr.mxu0 0.0
    %860 = vmatpush1.msra.mxu0 0.0
    %861 = vmatprep.subr.mxu0 0.0
    %862 = vmatpush1.msra.mxu0 0.0
    %863 = vmatprep.subr.mxu0 0.0
    %864 = vmatpush1.msra.mxu0 0.0
    %865 = vmatprep.subr.mxu0 0.0
    %866 = vmatpush1.msra.mxu0 0.0
    %867 = vmatprep.subr.mxu0 0.0
    %868 = vmatpush1.msra.mxu0 0.0
    %869 = vmatprep.subr.mxu0 0.0
    %870 = vmatpush1.msra.mxu0 0.0
    %871 = vmatprep.mubr.f32.mxu0 0.0
    %872 = vmatmul.mubr.f32.gmra.mrb[0].mxu0 %v802
    %v873 = vpop.f32.mrb[0].mxu0
    %v874 = vadd.f32 0.0, %v873
    %v875 = vpop.f32.mrb[0].mxu0
    %876 = vdwg.mxu0
    %v877 = vld [vmem:[#allocation2 + $0x4a] sm:$0x1]
    %879 = vset.pattern.permute.xlu0 6
    %880 = vperm.xlu0 %879, %v57
    %v881 = vpop.permute.xlu0 %880
    %v883 = vlaneseq
    %v884 = vshrl.u32 %v883, 7
    %v885 = vsub.s32 0, %v884
    %v886 = vrot.slane %v877, %v885
    %v887 = vmul.f32 %v881, %v886
    %v888 = vld [vmem:[#allocation2 + $0x4b] sm:$0x1]
    %v889 = vlaneseq
    %v890 = vshrl.u32 %v889, 7
    %v891 = vsub.s32 0, %v890
    %v892 = vrot.slane %v888, %v891
    %v893 = vadd.f32 %v887, %v892
    %v894 = vmax.f32 %v893, 0.0
    %v895 = vld [vmem:[#allocation2 + $0x4c] sm:$0x1]
    %v896 = vld [vmem:[#allocation2 + $0x4d] sm:$0x1]
    %vm897 = vcmask 58368
    %v898 = vsel %vm897, %v894, 0.0
    %899 = vadd.xlane.f32.xlu0 %v898
    %v900 = vpop.xlane.xlu0 %899
    %v901 = vrcp.pop 8.0
    %v902 = vmul.f32 %v900, %v901
    %v903 = vsub.f32 %v894, %v902
    %v904 = vmul.f32 %v903, %v903
    %v905 = vsel %vm897, %v904, 0.0
    %906 = vadd.xlane.f32.xlu0 %v905
    %v907 = vpop.xlane.xlu0 %906
    %v908 = vmul.f32 %v907, %v901
    %v909 = vadd.f32 %v908, 1e-05
    %v910 = vrsqrt.pop %v909
    %v911 = vmul.f32 %v903, %v910
    %v912 = vlaneseq
    %v913 = vshrl.u32 %v912, 7
    %v914 = vsub.s32 0, %v913
    %v915 = vrot.slane %v895, %v914
    %v916 = vmul.f32 %v911, %v915
    %v917 = vlaneseq
    %v918 = vshrl.u32 %v917, 7
    %v919 = vsub.s32 0, %v918
    %v920 = vrot.slane %v896, %v919
    %v921 = vadd.f32 %v916, %v920
    %v922 = vpack.c.bf16 %v57, %v57
    %v923 = vld [vmem:[#allocation4 + $0x90] sm:$0xf]
    %925 = vrot.lane.b32.xlu0 %v922, 120
    %v926 = vpop.permute.xlu0 %925
    %vm927 = vcmask 64512
    %v929 = vsel %vm927, %v926, 0
    %v932 = vsel %vm242, %v923, 0
    %934 = vmatprep.subr.bf16.mxu0 0
    %935 = vmatpush1.bf16.msra.mxu0 %v932
    %936 = vmatprep.subr.bf16.mxu0 0
    %937 = vmatpush1.bf16.msra.mxu0 0
    %938 = vmatprep.subr.bf16.mxu0 0
    %939 = vmatpush1.bf16.msra.mxu0 0
    %940 = vmatprep.subr.bf16.mxu0 0
    %941 = vmatpush1.bf16.msra.mxu0 0
    %942 = vmatprep.subr.bf16.mxu0 0
    %943 = vmatpush1.bf16.msra.mxu0 0
    %944 = vmatprep.subr.bf16.mxu0 0
    %945 = vmatpush1.bf16.msra.mxu0 0
    %946 = vmatprep.subr.bf16.mxu0 0
    %947 = vmatpush1.bf16.msra.mxu0 0
    %948 = vmatprep.subr.bf16.mxu0 0
    %949 = vmatpush1.bf16.msra.mxu0 0
    %950 = vmatprep.subr.bf16.mxu0 0
    %951 = vmatpush1.bf16.msra.mxu0 0
    %952 = vmatprep.subr.bf16.mxu0 0
    %953 = vmatpush1.bf16.msra.mxu0 0
    %954 = vmatprep.subr.bf16.mxu0 0
    %955 = vmatpush1.bf16.msra.mxu0 0
    %956 = vmatprep.subr.bf16.mxu0 0
    %957 = vmatpush1.bf16.msra.mxu0 0
    %958 = vmatprep.subr.bf16.mxu0 0
    %959 = vmatpush1.bf16.msra.mxu0 0
    %960 = vmatprep.subr.bf16.mxu0 0
    %961 = vmatpush1.bf16.msra.mxu0 0
    %962 = vmatprep.subr.bf16.mxu0 0
    %963 = vmatpush1.bf16.msra.mxu0 0
    %964 = vmatprep.subr.bf16.mxu0 0
    %965 = vmatpush1.bf16.msra.mxu0 0
    %966 = vmatprep.mubr.bf16.mxu0 0
    %967 = vmatmul.mubr.bf16.gmra.mrb[0].mxu0 %v929
    %v968 = vpop.f32.mrb[0].mxu0
    %v969 = vadd.f32 0.0, %v968
    %v970 = vpop.f32.mrb[0].mxu0
    %v971 = vpop.f32.mrb[0].mxu0
    %v972 = vpop.f32.mrb[0].mxu0
    %973 = vdwg.mxu0
    %v974 = vpack.c.bf16 %v969, %v969
    %v975 = vld [vmem:[#allocation4 + $0x98] sm:$0xf]
    %v976 = vld [vmem:[#allocation4 + $0x9c] sm:$0xf]
    %v977 = vpack.c.bf16 %v921, %v921
    %v978 = vld [vmem:[#allocation4 + $0xa0] sm:$0xf]
    %v980 = vsel %vm927, %v977, 0
    %v983 = vsel %vm242, %v978, 0
    %985 = vmatprep.subr.bf16.mxu0 0
    %986 = vmatpush1.bf16.msra.mxu0 %v983
    %987 = vmatprep.subr.bf16.mxu0 0
    %988 = vmatpush1.bf16.msra.mxu0 0
    %989 = vmatprep.subr.bf16.mxu0 0
    %990 = vmatpush1.bf16.msra.mxu0 0
    %991 = vmatprep.subr.bf16.mxu0 0
    %992 = vmatpush1.bf16.msra.mxu0 0
    %993 = vmatprep.subr.bf16.mxu0 0
    %994 = vmatpush1.bf16.msra.mxu0 0
    %995 = vmatprep.subr.bf16.mxu0 0
    %996 = vmatpush1.bf16.msra.mxu0 0
    %997 = vmatprep.subr.bf16.mxu0 0
    %998 = vmatpush1.bf16.msra.mxu0 0
    %999 = vmatprep.subr.bf16.mxu0 0
    %1000 = vmatpush1.bf16.msra.mxu0 0
    %1001 = vmatprep.subr.bf16.mxu0 0
    %1002 = vmatpush1.bf16.msra.mxu0 0
    %1003 = vmatprep.subr.bf16.mxu0 0
    %1004 = vmatpush1.bf16.msra.mxu0 0
    %1005 = vmatprep.subr.bf16.mxu0 0
    %1006 = vmatpush1.bf16.msra.mxu0 0
    %1007 = vmatprep.subr.bf16.mxu0 0
    %1008 = vmatpush1.bf16.msra.mxu0 0
    %1009 = vmatprep.subr.bf16.mxu0 0
    %1010 = vmatpush1.bf16.msra.mxu0 0
    %1011 = vmatprep.subr.bf16.mxu0 0
    %1012 = vmatpush1.bf16.msra.mxu0 0
    %1013 = vmatprep.subr.bf16.mxu0 0
    %1014 = vmatpush1.bf16.msra.mxu0 0
    %1015 = vmatprep.subr.bf16.mxu0 0
    %1016 = vmatpush1.bf16.msra.mxu0 0
    %1017 = vmatprep.mubr.bf16.mxu0 0
    %1018 = vmatmul.mubr.bf16.gmra.mrb[0].mxu0 %v980
    %v1019 = vpop.f32.mrb[0].mxu0
    %v1020 = vadd.f32 0.0, %v1019
    %v1021 = vpop.f32.mrb[0].mxu0
    %v1022 = vpop.f32.mrb[0].mxu0
    %v1023 = vpop.f32.mrb[0].mxu0
    %1024 = vdwg.mxu0
    %v1027 = vunpack.c.l.b16 %v975
    %v1028 = vunpack.c.l.b16 %v976
    %v1029 = vpack.c.b16 %v1028, %v1027
    %vm1031 = vcmask 130048
    %v1033 = vsel %vm1031, %v974, 0
    %1035 = vmatprep.subr.bf16.mxu0 0
    %1036 = vmatpush1.bf16.msra.mxu0 %v1029
    %1037 = vmatprep.subr.bf16.mxu0 0
    %1038 = vmatpush1.bf16.msra.mxu0 0
    %1039 = vmatprep.subr.bf16.mxu0 0
    %1040 = vmatpush1.bf16.msra.mxu0 0
    %1041 = vmatprep.subr.bf16.mxu0 0
    %1042 = vmatpush1.bf16.msra.mxu0 0
    %1043 = vmatprep.subr.bf16.mxu0 0
    %1044 = vmatpush1.bf16.msra.mxu0 0
    %1045 = vmatprep.subr.bf16.mxu0 0
    %1046 = vmatpush1.bf16.msra.mxu0 0
    %1047 = vmatprep.subr.bf16.mxu0 0
    %1048 = vmatpush1.bf16.msra.mxu0 0
    %1049 = vmatprep.subr.bf16.mxu0 0
    %1050 = vmatpush1.bf16.msra.mxu0 0
    %1051 = vmatprep.subr.bf16.mxu0 0
    %1052 = vmatpush1.bf16.msra.mxu0 0
    %1053 = vmatprep.subr.bf16.mxu0 0
    %1054 = vmatpush1.bf16.msra.mxu0 0
    %1055 = vmatprep.subr.bf16.mxu0 0
    %1056 = vmatpush1.bf16.msra.mxu0 0
    %1057 = vmatprep.subr.bf16.mxu0 0
    %1058 = vmatpush1.bf16.msra.mxu0 0
    %1059 = vmatprep.subr.bf16.mxu0 0
    %1060 = vmatpush1.bf16.msra.mxu0 0
    %1061 = vmatprep.subr.bf16.mxu0 0
    %1062 = vmatpush1.bf16.msra.mxu0 0
    %1063 = vmatprep.subr.bf16.mxu0 0
    %1064 = vmatpush1.bf16.msra.mxu0 0
    %1065 = vmatprep.subr.bf16.mxu0 0
    %1066 = vmatpush1.bf16.msra.mxu0 0
    %1067 = vmatprep.mubr.bf16.mxu0 0
    %1068 = vmatmul.mubr.bf16.gmra.mrb[0].mxu0 %v1033
    %v1069 = vpop.f32.mrb[0].mxu0
    %v1070 = vadd.f32 %v1020, %v1069
    %v1071 = vpop.f32.mrb[0].mxu0
    %v1072 = vpop.f32.mrb[0].mxu0
    %v1073 = vpop.f32.mrb[0].mxu0
    %1074 = vdwg.mxu0
    %v1075 = vld [vmem:[#allocation2 + $0x4e] sm:$0x1]
    %v1076 = vlaneseq
    %v1077 = vshrl.u32 %v1076, 7
    %v1078 = vsub.s32 0, %v1077
    %v1079 = vrot.slane %v1075, %v1078
    %v1080 = vadd.f32 %v1070, %v1079
    %v1081 = vmax.f32 %v1080, 0.0
    %v1082 = vld [vmem:[#allocation2 + $0x4f] sm:$0x1]
    %v1083 = vld [vmem:[#allocation2 + $0x50] sm:$0x1]
    %vm1084 = vcmask 123904
    %v1085 = vsel %vm1084, %v1081, 0.0
    %1086 = vadd.xlane.f32.xlu0 %v1085
    %v1087 = vpop.xlane.xlu0 %1086
    %v1088 = vrcp.pop 16.0
    %v1089 = vmul.f32 %v1087, %v1088
    %v1090 = vsub.f32 %v1081, %v1089
    %v1091 = vmul.f32 %v1090, %v1090
    %v1092 = vsel %vm1084, %v1091, 0.0
    %1093 = vadd.xlane.f32.xlu0 %v1092
    %v1094 = vpop.xlane.xlu0 %1093
    %v1095 = vmul.f32 %v1094, %v1088
    %v1096 = vadd.f32 %v1095, 1e-05
    %v1097 = vrsqrt.pop %v1096
    %v1098 = vmul.f32 %v1090, %v1097
    %v1099 = vlaneseq
    %v1100 = vshrl.u32 %v1099, 7
    %v1101 = vsub.s32 0, %v1100
    %v1102 = vrot.slane %v1082, %v1101
    %v1103 = vmul.f32 %v1098, %v1102
    %v1104 = vlaneseq
    %v1105 = vshrl.u32 %v1104, 7
    %v1106 = vsub.s32 0, %v1105
    %v1107 = vrot.slane %v1083, %v1106
    %v1108 = vadd.f32 %v1103, %v1107
    %v1109 = vld [vmem:[#allocation4 + $0xa8] sm:$0x7]
    %v1110 = vld [vmem:[#allocation2 + $0x51] sm:$0x1]
    %v1111 = vlaneseq
    %v1112 = vshrl.u32 %v1111, 7
    %v1113 = vsub.s32 0, %v1112
    %v1114 = vrot.slane %v1110, %v1113
    %v1116 = vsel %vm800, %v922, 0
    %vm1118 = vcmask 1042432
    %v1120 = vsel %vm1118, %v1109, 0
    %1122 = vmatprep.subr.bf16.mxu0 0
    %1123 = vmatpush1.bf16.msra.mxu0 %v1120
    %1124 = vmatprep.subr.bf16.mxu0 0
    %1125 = vmatpush1.bf16.msra.mxu0 0
    %1126 = vmatprep.subr.bf16.mxu0 0
    %1127 = vmatpush1.bf16.msra.mxu0 0
    %1128 = vmatprep.subr.bf16.mxu0 0
    %1129 = vmatpush1.bf16.msra.mxu0 0
    %1130 = vmatprep.subr.bf16.mxu0 0
    %1131 = vmatpush1.bf16.msra.mxu0 0
    %1132 = vmatprep.subr.bf16.mxu0 0
    %1133 = vmatpush1.bf16.msra.mxu0 0
    %1134 = vmatprep.subr.bf16.mxu0 0
    %1135 = vmatpush1.bf16.msra.mxu0 0
    %1136 = vmatprep.subr.bf16.mxu0 0
    %1137 = vmatpush1.bf16.msra.mxu0 0
    %1138 = vmatprep.subr.bf16.mxu0 0
    %1139 = vmatpush1.bf16.msra.mxu0 0
    %1140 = vmatprep.subr.bf16.mxu0 0
    %1141 = vmatpush1.bf16.msra.mxu0 0
    %1142 = vmatprep.subr.bf16.mxu0 0
    %1143 = vmatpush1.bf16.msra.mxu0 0
    %1144 = vmatprep.subr.bf16.mxu0 0
    %1145 = vmatpush1.bf16.msra.mxu0 0
    %1146 = vmatprep.subr.bf16.mxu0 0
    %1147 = vmatpush1.bf16.msra.mxu0 0
    %1148 = vmatprep.subr.bf16.mxu0 0
    %1149 = vmatpush1.bf16.msra.mxu0 0
    %1150 = vmatprep.subr.bf16.mxu0 0
    %1151 = vmatpush1.bf16.msra.mxu0 0
    %1152 = vmatprep.subr.bf16.mxu0 0
    %1153 = vmatpush1.bf16.msra.mxu0 0
    %1154 = vmatprep.mubr.bf16.mxu0 0
    %1155 = vmatmul.mubr.bf16.gmra.mrb[0].mxu0 %v1116
    %v1156 = vpop.f32.mrb[0].mxu0
    %v1157 = vadd.f32 %v1114, %v1156
    %v1158 = vpop.f32.mrb[0].mxu0
    %v1159 = vpop.f32.mrb[0].mxu0
    %v1160 = vpop.f32.mrb[0].mxu0
    %1161 = vdwg.mxu0
    %v1162 = vmax.f32 %v1157, 0.0
    %v1163 = vld [vmem:[#allocation2 + $0x52] sm:$0x1]
    %v1164 = vld [vmem:[#allocation2 + $0x53] sm:$0x1]
    %v1165 = vsel %vm1084, %v1162, 0.0
    %1166 = vadd.xlane.f32.xlu0 %v1165
    %v1167 = vpop.xlane.xlu0 %1166
    %v1168 = vmul.f32 %v1167, %v1088
    %v1169 = vsub.f32 %v1162, %v1168
    %v1170 = vmul.f32 %v1169, %v1169
    %v1171 = vsel %vm1084, %v1170, 0.0
    %1172 = vadd.xlane.f32.xlu0 %v1171
    %v1173 = vpop.xlane.xlu0 %1172
    %v1174 = vmul.f32 %v1173, %v1088
    %v1175 = vadd.f32 %v1174, 1e-05
    %v1176 = vrsqrt.pop %v1175
    %v1177 = vmul.f32 %v1169, %v1176
    %v1178 = vlaneseq
    %v1179 = vshrl.u32 %v1178, 7
    %v1180 = vsub.s32 0, %v1179
    %v1181 = vrot.slane %v1163, %v1180
    %v1182 = vmul.f32 %v1177, %v1181
    %v1183 = vlaneseq
    %v1184 = vshrl.u32 %v1183, 7
    %v1185 = vsub.s32 0, %v1184
    %v1186 = vrot.slane %v1164, %v1185
    %v1187 = vadd.f32 %v1182, %v1186
    %vm1188 = vcmask 254976
    %v1189 = vsel %vm1188, %v874, 0.0
    %1190 = vadd.xlane.f32.xlu0 %v1189
    %v1191 = vpop.xlane.xlu0 %1190
    %v1192 = vadd.f32 %v1191, 0.0
    %v1193 = vsel %vm897, %v921, 0.0
    %1194 = vadd.xlane.f32.xlu0 %v1193
    %v1195 = vpop.xlane.xlu0 %1194
    %v1196 = vadd.f32 %v1192, %v1195
    %v1197 = vsel %vm1084, %v969, 0.0
    %1198 = vadd.xlane.f32.xlu0 %v1197
    %v1199 = vpop.xlane.xlu0 %1198
    %v1200 = vadd.f32 %v1196, %v1199
    %v1201 = vsel %vm1084, %v1108, 0.0
    %1202 = vadd.xlane.f32.xlu0 %v1201
    %v1203 = vpop.xlane.xlu0 %1202
    %v1204 = vadd.f32 %v1200, %v1203
    %v1205 = vsel %vm1084, %v1187, 0.0
    %1206 = vadd.xlane.f32.xlu0 %v1205
    %v1207 = vpop.xlane.xlu0 %1206
    %v1208 = vadd.f32 %v1204, %v1207
    %v1209 = vmul.f32 %v1208, 0.011363637
    %v1210 = vsub.f32 %v874, %v1209
    %v1211 = vmul.f32 %v1210, %v1210
    %v1212 = vsel %vm1188, %v1211, 0.0
    %1213 = vadd.xlane.f32.xlu0 %v1212
    %v1214 = vpop.xlane.xlu0 %1213
    %v1215 = vadd.f32 %v1214, 0.0
    %v1216 = vsub.f32 %v921, %v1209
    %v1217 = vmul.f32 %v1216, %v1216
    %v1218 = vsel %vm897, %v1217, 0.0
    %1219 = vadd.xlane.f32.xlu0 %v1218
    %v1220 = vpop.xlane.xlu0 %1219
    %v1221 = vadd.f32 %v1215, %v1220
    %v1222 = vsub.f32 %v969, %v1209
    %v1223 = vmul.f32 %v1222, %v1222
    %v1224 = vsel %vm1084, %v1223, 0.0
    %1225 = vadd.xlane.f32.xlu0 %v1224
    %v1226 = vpop.xlane.xlu0 %1225
    %v1227 = vadd.f32 %v1221, %v1226
    %v1228 = vsub.f32 %v1108, %v1209
    %v1229 = vmul.f32 %v1228, %v1228
    %v1230 = vsel %vm1084, %v1229, 0.0
    %1231 = vadd.xlane.f32.xlu0 %v1230
    %v1232 = vpop.xlane.xlu0 %1231
    %v1233 = vadd.f32 %v1227, %v1232
    %v1234 = vsub.f32 %v1187, %v1209
    %v1235 = vmul.f32 %v1234, %v1234
    %v1236 = vsel %vm1084, %v1235, 0.0
    %1237 = vadd.xlane.f32.xlu0 %v1236
    %v1238 = vpop.xlane.xlu0 %1237
    %v1239 = vadd.f32 %v1233, %v1238
    %v1240 = vmul.f32 %v1239, 0.011363637
    %v1241 = vadd.f32 %v1240, 1e-05
    %v1242 = vrsqrt.pop %v1241
    %v1243 = vmul.f32 %v1210, %v1242
    %v1244 = vld [vmem:[#allocation2 + $0x57] sm:$0x1]
    %v1245 = vlaneseq
    %v1246 = vshrl.u32 %v1245, 7
    %v1247 = vsub.s32 0, %v1246
    %v1248 = vrot.slane %v1244, %v1247
    %v1249 = vmul.f32 %v1243, %v1248
    %v1250 = vld [vmem:[#allocation2 + $0x58] sm:$0x1]
    %v1251 = vlaneseq
    %v1252 = vshrl.u32 %v1251, 7
    %v1253 = vsub.s32 0, %v1252
    %v1254 = vrot.slane %v1250, %v1253
    %v1255 = vadd.f32 %v1249, %v1254
    %v1256 = vpack.c.bf16 %v1255, %v1255
    %v1257 = vld [vmem:[#allocation4 + $0xb0] sm:$0xf]
    %v1258 = vld [vmem:[#allocation4 + $0xb4] sm:$0xf]
    %v1259 = vld [vmem:[#allocation4 + $0xb8] sm:$0xf]
    %v1260 = vld [vmem:[#allocation4 + $0xbc] sm:$0xf]
    %v1261 = vmul.f32 %v1216, %v1242
    %v1262 = vld [vmem:[#allocation2 + $0x59] sm:$0x1]
    %v1263 = vlaneseq
    %v1264 = vshrl.u32 %v1263, 7
    %v1265 = vsub.s32 0, %v1264
    %v1266 = vrot.slane %v1262, %v1265
    %v1267 = vmul.f32 %v1261, %v1266
    %v1268 = vld [vmem:[#allocation2 + $0x5a] sm:$0x1]
    %v1269 = vlaneseq
    %v1270 = vshrl.u32 %v1269, 7
    %v1271 = vsub.s32 0, %v1270
    %v1272 = vrot.slane %v1268, %v1271
    %v1273 = vadd.f32 %v1267, %v1272
    %v1274 = vpack.c.bf16 %v1273, %v1273
    %v1275 = vld [vmem:[#allocation4 + $0xc0] sm:$0xf]
    %v1277 = vsel %vm927, %v1274, 0
    %v1280 = vsel %vm242, %v1275, 0
    %1282 = vmatprep.subr.bf16.mxu0 0
    %1283 = vmatpush1.bf16.msra.mxu0 %v1280
    %1284 = vmatprep.subr.bf16.mxu0 0
    %1285 = vmatpush1.bf16.msra.mxu0 0
    %1286 = vmatprep.subr.bf16.mxu0 0
    %1287 = vmatpush1.bf16.msra.mxu0 0
    %1288 = vmatprep.subr.bf16.mxu0 0
    %1289 = vmatpush1.bf16.msra.mxu0 0
    %1290 = vmatprep.subr.bf16.mxu0 0
    %1291 = vmatpush1.bf16.msra.mxu0 0
    %1292 = vmatprep.subr.bf16.mxu0 0
    %1293 = vmatpush1.bf16.msra.mxu0 0
    %1294 = vmatprep.subr.bf16.mxu0 0
    %1295 = vmatpush1.bf16.msra.mxu0 0
    %1296 = vmatprep.subr.bf16.mxu0 0
    %1297 = vmatpush1.bf16.msra.mxu0 0
    %1298 = vmatprep.subr.bf16.mxu0 0
    %1299 = vmatpush1.bf16.msra.mxu0 0
    %1300 = vmatprep.subr.bf16.mxu0 0
    %1301 = vmatpush1.bf16.msra.mxu0 0
    %1302 = vmatprep.subr.bf16.mxu0 0
    %1303 = vmatpush1.bf16.msra.mxu0 0
    %1304 = vmatprep.subr.bf16.mxu0 0
    %1305 = vmatpush1.bf16.msra.mxu0 0
    %1306 = vmatprep.subr.bf16.mxu0 0
    %1307 = vmatpush1.bf16.msra.mxu0 0
    %1308 = vmatprep.subr.bf16.mxu0 0
    %1309 = vmatpush1.bf16.msra.mxu0 0
    %1310 = vmatprep.subr.bf16.mxu0 0
    %1311 = vmatpush1.bf16.msra.mxu0 0
    %1312 = vmatprep.subr.bf16.mxu0 0
    %1313 = vmatpush1.bf16.msra.mxu0 0
    %1314 = vmatprep.mubr.bf16.mxu0 0
    %1315 = vmatmul.mubr.bf16.gmra.mrb[0].mxu0 %v1277
    %v1316 = vpop.f32.mrb[0].mxu0
    %v1317 = vadd.f32 0.0, %v1316
    %v1318 = vpop.f32.mrb[0].mxu0
    %v1319 = vpop.f32.mrb[0].mxu0
    %v1320 = vpop.f32.mrb[0].mxu0
    %1321 = vdwg.mxu0
    %v1326 = vunpack.c.l.b16 %v1257
    %v1327 = vunpack.c.l.b16 %v1258
    %v1328 = vunpack.c.l.b16 %v1259
    %v1329 = vunpack.c.l.b16 %v1260
    %v1330 = vpack.c.b16 %v1327, %v1326
    %v1331 = vpack.c.b16 %v1329, %v1328
    %v1335 = vsel %vm186, %v1256, 0
    %1337 = vmatprep.subr.bf16.mxu0 0
    %1338 = vmatpush1.bf16.msra.mxu0 %v1330
    %1339 = vmatprep.subr.bf16.mxu0 0
    %1340 = vmatpush1.bf16.msra.mxu0 %v1331
    %1341 = vmatprep.subr.bf16.mxu0 0
    %1342 = vmatpush1.bf16.msra.mxu0 0
    %1343 = vmatprep.subr.bf16.mxu0 0
    %1344 = vmatpush1.bf16.msra.mxu0 0
    %1345 = vmatprep.subr.bf16.mxu0 0
    %1346 = vmatpush1.bf16.msra.mxu0 0
    %1347 = vmatprep.subr.bf16.mxu0 0
    %1348 = vmatpush1.bf16.msra.mxu0 0
    %1349 = vmatprep.subr.bf16.mxu0 0
    %1350 = vmatpush1.bf16.msra.mxu0 0
    %1351 = vmatprep.subr.bf16.mxu0 0
    %1352 = vmatpush1.bf16.msra.mxu0 0
    %1353 = vmatprep.subr.bf16.mxu0 0
    %1354 = vmatpush1.bf16.msra.mxu0 0
    %1355 = vmatprep.subr.bf16.mxu0 0
    %1356 = vmatpush1.bf16.msra.mxu0 0
    %1357 = vmatprep.subr.bf16.mxu0 0
    %1358 = vmatpush1.bf16.msra.mxu0 0
    %1359 = vmatprep.subr.bf16.mxu0 0
    %1360 = vmatpush1.bf16.msra.mxu0 0
    %1361 = vmatprep.subr.bf16.mxu0 0
    %1362 = vmatpush1.bf16.msra.mxu0 0
    %1363 = vmatprep.subr.bf16.mxu0 0
    %1364 = vmatpush1.bf16.msra.mxu0 0
    %1365 = vmatprep.subr.bf16.mxu0 0
    %1366 = vmatpush1.bf16.msra.mxu0 0
    %1367 = vmatprep.subr.bf16.mxu0 0
    %1368 = vmatpush1.bf16.msra.mxu0 0
    %1369 = vmatprep.mubr.bf16.mxu0 0
    %1370 = vmatmul.mubr.bf16.gmra.mrb[0].mxu0 %v1335
    %v1371 = vpop.f32.mrb[0].mxu0
    %v1372 = vadd.f32 %v1317, %v1371
    %v1373 = vpop.f32.mrb[0].mxu0
    %v1374 = vpop.f32.mrb[0].mxu0
    %v1375 = vpop.f32.mrb[0].mxu0
    %1376 = vdwg.mxu0
    %v1377 = vmul.f32 %v1222, %v1242
    %v1378 = vld [vmem:[#allocation2 + $0x5b] sm:$0x1]
    %v1379 = vlaneseq
    %v1380 = vshrl.u32 %v1379, 7
    %v1381 = vsub.s32 0, %v1380
    %v1382 = vrot.slane %v1378, %v1381
    %v1383 = vmul.f32 %v1377, %v1382
    %v1384 = vld [vmem:[#allocation2 + $0x5c] sm:$0x1]
    %v1385 = vlaneseq
    %v1386 = vshrl.u32 %v1385, 7
    %v1387 = vsub.s32 0, %v1386
    %v1388 = vrot.slane %v1384, %v1387
    %v1389 = vadd.f32 %v1383, %v1388
    %v1390 = vpack.c.bf16 %v1389, %v1389
    %v1391 = vld [vmem:[#allocation4 + $0xc8] sm:$0xf]
    %v1392 = vld [vmem:[#allocation4 + $0xcc] sm:$0xf]
    %v1395 = vunpack.c.l.b16 %v1391
    %v1396 = vunpack.c.l.b16 %v1392
    %v1397 = vpack.c.b16 %v1396, %v1395
    %v1400 = vsel %vm1031, %v1390, 0
    %1402 = vmatprep.subr.bf16.mxu0 0
    %1403 = vmatpush1.bf16.msra.mxu0 %v1397
    %1404 = vmatprep.subr.bf16.mxu0 0
    %1405 = vmatpush1.bf16.msra.mxu0 0
    %1406 = vmatprep.subr.bf16.mxu0 0
    %1407 = vmatpush1.bf16.msra.mxu0 0
    %1408 = vmatprep.subr.bf16.mxu0 0
    %1409 = vmatpush1.bf16.msra.mxu0 0
    %1410 = vmatprep.subr.bf16.mxu0 0
    %1411 = vmatpush1.bf16.msra.mxu0 0
    %1412 = vmatprep.subr.bf16.mxu0 0
    %1413 = vmatpush1.bf16.msra.mxu0 0
    %1414 = vmatprep.subr.bf16.mxu0 0
    %1415 = vmatpush1.bf16.msra.mxu0 0
    %1416 = vmatprep.subr.bf16.mxu0 0
    %1417 = vmatpush1.bf16.msra.mxu0 0
    %1418 = vmatprep.subr.bf16.mxu0 0
    %1419 = vmatpush1.bf16.msra.mxu0 0
    %1420 = vmatprep.subr.bf16.mxu0 0
    %1421 = vmatpush1.bf16.msra.mxu0 0
    %1422 = vmatprep.subr.bf16.mxu0 0
    %1423 = vmatpush1.bf16.msra.mxu0 0
    %1424 = vmatprep.subr.bf16.mxu0 0
    %1425 = vmatpush1.bf16.msra.mxu0 0
    %1426 = vmatprep.subr.bf16.mxu0 0
    %1427 = vmatpush1.bf16.msra.mxu0 0
    %1428 = vmatprep.subr.bf16.mxu0 0
    %1429 = vmatpush1.bf16.msra.mxu0 0
    %1430 = vmatprep.subr.bf16.mxu0 0
    %1431 = vmatpush1.bf16.msra.mxu0 0
    %1432 = vmatprep.subr.bf16.mxu0 0
    %1433 = vmatpush1.bf16.msra.mxu0 0
    %1434 = vmatprep.mubr.bf16.mxu0 0
    %1435 = vmatmul.mubr.bf16.gmra.mrb[0].mxu0 %v1400
    %v1436 = vpop.f32.mrb[0].mxu0
    %v1437 = vadd.f32 0.0, %v1436
    %v1438 = vpop.f32.mrb[0].mxu0
    %v1439 = vpop.f32.mrb[0].mxu0
    %v1440 = vpop.f32.mrb[0].mxu0
    %1441 = vdwg.mxu0
    %v1442 = vadd.f32 %v1372, %v1437
    %v1443 = vmul.f32 %v1228, %v1242
    %v1444 = vld [vmem:[#allocation2 + $0x5d] sm:$0x1]
    %v1445 = vlaneseq
    %v1446 = vshrl.u32 %v1445, 7
    %v1447 = vsub.s32 0, %v1446
    %v1448 = vrot.slane %v1444, %v1447
    %v1449 = vmul.f32 %v1443, %v1448
    %v1450 = vld [vmem:[#allocation2 + $0x5e] sm:$0x1]
    %v1451 = vlaneseq
    %v1452 = vshrl.u32 %v1451, 7
    %v1453 = vsub.s32 0, %v1452
    %v1454 = vrot.slane %v1450, %v1453
    %v1455 = vadd.f32 %v1449, %v1454
    %v1456 = vpack.c.bf16 %v1455, %v1455
    %v1457 = vld [vmem:[#allocation4 + $0xd0] sm:$0xf]
    %v1458 = vld [vmem:[#allocation4 + $0xd4] sm:$0xf]
    %v1461 = vunpack.c.l.b16 %v1457
    %v1462 = vunpack.c.l.b16 %v1458
    %v1463 = vpack.c.b16 %v1462, %v1461
    %v1466 = vsel %vm1031, %v1456, 0
    %1468 = vmatprep.subr.bf16.mxu0 0
    %1469 = vmatpush1.bf16.msra.mxu0 %v1463
    %1470 = vmatprep.subr.bf16.mxu0 0
    %1471 = vmatpush1.bf16.msra.mxu0 0
    %1472 = vmatprep.subr.bf16.mxu0 0
    %1473 = vmatpush1.bf16.msra.mxu0 0
    %1474 = vmatprep.subr.bf16.mxu0 0
    %1475 = vmatpush1.bf16.msra.mxu0 0
    %1476 = vmatprep.subr.bf16.mxu0 0
    %1477 = vmatpush1.bf16.msra.mxu0 0
    %1478 = vmatprep.subr.bf16.mxu0 0
    %1479 = vmatpush1.bf16.msra.mxu0 0
    %1480 = vmatprep.subr.bf16.mxu0 0
    %1481 = vmatpush1.bf16.msra.mxu0 0
    %1482 = vmatprep.subr.bf16.mxu0 0
    %1483 = vmatpush1.bf16.msra.mxu0 0
    %1484 = vmatprep.subr.bf16.mxu0 0
    %1485 = vmatpush1.bf16.msra.mxu0 0
    %1486 = vmatprep.subr.bf16.mxu0 0
    %1487 = vmatpush1.bf16.msra.mxu0 0
    %1488 = vmatprep.subr.bf16.mxu0 0
    %1489 = vmatpush1.bf16.msra.mxu0 0
    %1490 = vmatprep.subr.bf16.mxu0 0
    %1491 = vmatpush1.bf16.msra.mxu0 0
    %1492 = vmatprep.subr.bf16.mxu0 0
    %1493 = vmatpush1.bf16.msra.mxu0 0
    %1494 = vmatprep.subr.bf16.mxu0 0
    %1495 = vmatpush1.bf16.msra.mxu0 0
    %1496 = vmatprep.subr.bf16.mxu0 0
    %1497 = vmatpush1.bf16.msra.mxu0 0
    %1498 = vmatprep.subr.bf16.mxu0 0
    %1499 = vmatpush1.bf16.msra.mxu0 0
    %1500 = vmatprep.mubr.bf16.mxu0 0
    %1501 = vmatmul.mubr.bf16.gmra.mrb[0].mxu0 %v1466
    %v1502 = vpop.f32.mrb[0].mxu0
    %v1503 = vadd.f32 0.0, %v1502
    %v1504 = vpop.f32.mrb[0].mxu0
    %v1505 = vpop.f32.mrb[0].mxu0
    %v1506 = vpop.f32.mrb[0].mxu0
    %1507 = vdwg.mxu0
    %v1508 = vadd.f32 %v1442, %v1503
    %v1509 = vmul.f32 %v1234, %v1242
    %v1510 = vld [vmem:[#allocation2 + $0x5f] sm:$0x1]
    %v1511 = vlaneseq
    %v1512 = vshrl.u32 %v1511, 7
    %v1513 = vsub.s32 0, %v1512
    %v1514 = vrot.slane %v1510, %v1513
    %v1515 = vmul.f32 %v1509, %v1514
    %v1516 = vld [vmem:[#allocation2 + $0x60] sm:$0x1]
    %v1517 = vlaneseq
    %v1518 = vshrl.u32 %v1517, 7
    %v1519 = vsub.s32 0, %v1518
    %v1520 = vrot.slane %v1516, %v1519
    %v1521 = vadd.f32 %v1515, %v1520
    %v1522 = vpack.c.bf16 %v1521, %v1521
    %v1523 = vld [vmem:[#allocation4 + $0xd8] sm:$0xf]
    %v1524 = vld [vmem:[#allocation4 + $0xdc] sm:$0xf]
    %v1527 = vunpack.c.l.b16 %v1523
    %v1528 = vunpack.c.l.b16 %v1524
    %v1529 = vpack.c.b16 %v1528, %v1527
    %v1532 = vsel %vm1031, %v1522, 0
    %1534 = vmatprep.subr.bf16.mxu0 0
    %1535 = vmatpush1.bf16.msra.mxu0 %v1529
    %1536 = vmatprep.subr.bf16.mxu0 0
    %1537 = vmatpush1.bf16.msra.mxu0 0
    %1538 = vmatprep.subr.bf16.mxu0 0
    %1539 = vmatpush1.bf16.msra.mxu0 0
    %1540 = vmatprep.subr.bf16.mxu0 0
    %1541 = vmatpush1.bf16.msra.mxu0 0
    %1542 = vmatprep.subr.bf16.mxu0 0
    %1543 = vmatpush1.bf16.msra.mxu0 0
    %1544 = vmatprep.subr.bf16.mxu0 0
    %1545 = vmatpush1.bf16.msra.mxu0 0
    %1546 = vmatprep.subr.bf16.mxu0 0
    %1547 = vmatpush1.bf16.msra.mxu0 0
    %1548 = vmatprep.subr.bf16.mxu0 0
    %1549 = vmatpush1.bf16.msra.mxu0 0
    %1550 = vmatprep.subr.bf16.mxu0 0
    %1551 = vmatpush1.bf16.msra.mxu0 0
    %1552 = vmatprep.subr.bf16.mxu0 0
    %1553 = vmatpush1.bf16.msra.mxu0 0
    %1554 = vmatprep.subr.bf16.mxu0 0
    %1555 = vmatpush1.bf16.msra.mxu0 0
    %1556 = vmatprep.subr.bf16.mxu0 0
    %1557 = vmatpush1.bf16.msra.mxu0 0
    %1558 = vmatprep.subr.bf16.mxu0 0
    %1559 = vmatpush1.bf16.msra.mxu0 0
    %1560 = vmatprep.subr.bf16.mxu0 0
    %1561 = vmatpush1.bf16.msra.mxu0 0
    %1562 = vmatprep.subr.bf16.mxu0 0
    %1563 = vmatpush1.bf16.msra.mxu0 0
    %1564 = vmatprep.subr.bf16.mxu0 0
    %1565 = vmatpush1.bf16.msra.mxu0 0
    %1566 = vmatprep.mubr.bf16.mxu0 0
    %1567 = vmatmul.mubr.bf16.gmra.mrb[0].mxu0 %v1532
    %v1568 = vpop.f32.mrb[0].mxu0
    %v1569 = vadd.f32 0.0, %v1568
    %v1570 = vpop.f32.mrb[0].mxu0
    %v1571 = vpop.f32.mrb[0].mxu0
    %v1572 = vpop.f32.mrb[0].mxu0
    %1573 = vdwg.mxu0
    %v1574 = vadd.f32 %v1508, %v1569
    %v1575 = vld [vmem:[#allocation2 + $0x54] sm:$0x1]
    %v1576 = vlaneseq
    %v1577 = vshrl.u32 %v1576, 7
    %v1578 = vsub.s32 0, %v1577
    %v1579 = vrot.slane %v1575, %v1578
    %v1580 = vadd.f32 %v1574, %v1579
    %v1581 = vmax.f32 %v1580, 0.0
    %v1582 = vld [vmem:[#allocation2 + $0x55] sm:$0x1]
    %v1583 = vlaneseq
    %v1584 = vshrl.u32 %v1583, 7
    %v1585 = vsub.s32 0, %v1584
    %v1586 = vrot.slane %v1582, %v1585
    %v1587 = vmul.f32 %v1581, %v1586
    %vm1588 = vcmask 517120
    %v1589 = vsel %vm1588, %v1587, 0.0
    %1590 = vadd.xlane.f32.xlu0 %v1589
    %v1591 = vpop.xlane.xlu0 %1590
    %v1592 = vld [vmem:[#allocation2 + $0x56] sm:$0x1]
    %v1593 = vlaneseq
    %v1594 = vshrl.u32 %v1593, 7
    %v1595 = vsub.s32 0, %v1594
    %v1596 = vrot.slane %v1592, %v1595
    %v1597 = vadd.f32 %v1591, %v1596
    %1599 = vset.pattern.permute.xlu0 0
    %1600 = vperm.xlu0 %1599, %v1597
    %v1601 = vpop.permute.xlu0 %1600
    %1603 = vst [vmem:[%s3] sm:$0x3] %v1601
    // Predicated region
    $region26: #{forward.1} parent=1 // pred_check
      _
    $region27: #{forward.1} parent=1 // pred_check_branch
      %1605 = sbr.rel (0) target = $region29
    $region28: #{forward.1} parent=1 // pred_region
      _
    $region29: #{forward.1} parent=1 // pred_fallthru
      _
    // Predicated region
    $region30: #{forward.1} parent=1 // pred_check
      _
    $region31: #{forward.1} parent=1 // pred_check_branch
      %1607 = sbr.rel (0) target = $region33
    $region32: #{forward.1} parent=1 // pred_region
      _
    $region33: #{forward.1} parent=1 // pred_fallthru
      _
    %1608 = vsyncpa [#allocation3], 1
    %1609 = vsyncpa [#allocation5], 1

</llo_original>
